<compile_context>
chip_gen: v5e
topology: v5e:2x2
jax: 0.10.0
libtpu: 0.0.40
codegen_flags: <defaults>
</compile_context>

<pallas_src>
import functools

import jax
import jax.numpy as jnp
from jax.experimental import pallas as pl
from jax.experimental.pallas import tpu as pltpu


def _lstm_fused_kernel(x_ref, w_ih_ref, w_hh_ref, b_ref, out_ref, h_scr, c_scr):
    """One grid step == tc LSTM time steps over the whole batch.

    x_ref    : (tc, B, D)   f32   time-major input chunk
    w_ih_ref : (D, 4*Hp)    compute_dtype   input->gates weight (resident)
    w_hh_ref : (Hp, 4*Hp)   compute_dtype   hidden->gates weight (resident)
    b_ref    : (1, 4*Hp)    f32   folded bias b_ih + b_hh
    out_ref  : (tc, B, Hp)  f32   hidden states for this chunk (time-major)
    h_scr    : (B, Hp) compute_dtype  recurrent h, persists across chunks
    c_scr    : (B, Hp) f32            recurrent c, persists across chunks
    """
    chunk = pl.program_id(0)

    @pl.when(chunk == 0)
    def _init():
        h_scr[...] = jnp.zeros_like(h_scr)
        c_scr[...] = jnp.zeros_like(c_scr)

    w_ih = w_ih_ref[...]            # (D, 4Hp)
    w_hh = w_hh_ref[...]            # (Hp, 4Hp)
    bias = b_ref[...]               # (1, 4Hp) f32
    cd = w_hh.dtype
    hp = h_scr.shape[-1]
    tc = x_ref.shape[0]

    def step(t, carry):
        h_cd, c = carry             # h in compute dtype, c in f32 (registers)
        # Input projection for step t: independent of h_{t-1}, so with partial
        # unroll it overlaps the previous step's recurrent matmul on the MXU.
        x_t = x_ref[t].astype(cd)                                    # (B, D)
        gx = jnp.dot(x_t, w_ih, preferred_element_type=jnp.float32) + bias
        # Serial dependency: only the recurrent matmul + gate nonlinearities.
        gates = gx + jnp.dot(h_cd, w_hh, preferred_element_type=jnp.float32)
        # PyTorch gate order: i, f, g, o.  hp % 128 == 0 -> lane-aligned slices.
        i_g = jax.nn.sigmoid(gates[:, 0 * hp:1 * hp])
        f_g = jax.nn.sigmoid(gates[:, 1 * hp:2 * hp])
        g_g = jnp.tanh(gates[:, 2 * hp:3 * hp])
        o_g = jax.nn.sigmoid(gates[:, 3 * hp:4 * hp])
        c_new = f_g * c + i_g * g_g
        h_new = o_g * jnp.tanh(c_new)                                # f32
        out_ref[t] = h_new.astype(out_ref.dtype)      # lane-dense (B, Hp) store
        return h_new.astype(cd), c_new

    h_fin, c_fin = jax.lax.fori_loop(
        0, tc, step, (h_scr[...], c_scr[...]), unroll=min(8, tc))

    # Single cross-chunk state write-back.
    h_scr[...] = h_fin
    c_scr[...] = c_fin


@functools.partial(jax.jit, static_argnames=("compute_dtype", "t_chunk"))
def lstm_decoder_forward(x, w_ih, w_hh, b_ih, b_hh, *,
                         compute_dtype=jnp.bfloat16, t_chunk=64):
    """Equivalent of LSTMDecoder.forward (single layer, batch_first).

    x     : (B, T, D)  float32
    w_ih  : (4H, D)    PyTorch weight_ih_l0 layout (gates stacked i,f,g,o)
    w_hh  : (4H, H)    PyTorch weight_hh_l0
    b_ih, b_hh : (4H,)
    returns (B, T, H)
    """
    B, T, D = x.shape
    H = w_hh.shape[1]
    Hp = max(128, ((H + 127) // 128) * 128)      # pad hidden dim to lane width
    pad_h = Hp - H

    # Per-gate zero padding so each of i/f/g/o is a contiguous Hp lane block.
    # Zero weights/bias in the padded lanes keep padded h/c exactly 0 forever.
    w_ih_p = jnp.pad(w_ih.reshape(4, H, D),
                     ((0, 0), (0, pad_h), (0, 0))).reshape(4 * Hp, D)
    w_hh_p = jnp.pad(w_hh.reshape(4, H, H),
                     ((0, 0), (0, pad_h), (0, pad_h))).reshape(4 * Hp, Hp)
    b_p = jnp.pad((b_ih + b_hh).reshape(4, H),
                  ((0, 0), (0, pad_h))).reshape(1, 4 * Hp).astype(jnp.float32)

    # Pre-transposed weights for (rows @ W) matmuls; cast for MXU throughput.
    w_ih_t = jnp.transpose(w_ih_p).astype(compute_dtype)          # (D, 4Hp)
    w_hh_t = jnp.transpose(w_hh_p).astype(compute_dtype)          # (Hp, 4Hp)

    # Time chunking: grid over chunks of tc steps (time axis stays serial).
    tc = max(1, min(t_chunk, T))
    Tp = pl.cdiv(T, tc) * tc

    # Time-major x so every in-kernel dynamic index is on a leading dim.
    # (x is small: D << 4Hp, so this transpose is cheap vs the old gx stream.)
    x_tm = jnp.transpose(x, (1, 0, 2))                            # (T, B, D)
    if Tp != T:
        x_tm = jnp.pad(x_tm, ((0, Tp - T), (0, 0), (0, 0)))

    # VMEM budget (no double counting: the 2x factors ARE the double buffers).
    cd_size = jnp.dtype(compute_dtype).itemsize
    vmem_bytes = (
        2 * tc * B * D * 4                      # x blocks (double-buffered, f32)
        + 2 * tc * B * Hp * 4                   # out blocks (double-buffered, f32)
        + 2 * (D + Hp) * 4 * Hp * cd_size       # W_ih + W_hh (double-buffered)
        + 2 * 4 * Hp * 4                        # bias (double-buffered, f32)
        + B * Hp * (cd_size + 4)                # h / c state scratch
    )
    try:
        vmem_cap = int(pltpu.get_tpu_info().vmem_capacity_bytes)
    except Exception:
        vmem_cap = 64 << 20                     # conservative (v7x-sized) default
    vmem_limit = int(min(max(vmem_bytes + (4 << 20), 16 << 20),
                         (vmem_cap * 4) // 5))

    out_tm = pl.pallas_call(
        _lstm_fused_kernel,
        out_shape=jax.ShapeDtypeStruct((Tp, B, Hp), x.dtype),
        grid_spec=pltpu.PrefetchScalarGridSpec(
            num_scalar_prefetch=0,
            grid=(Tp // tc,),
            in_specs=[
                pl.BlockSpec((tc, B, D), lambda c: (c, 0, 0)),      # x chunk
                pl.BlockSpec((D, 4 * Hp), lambda c: (0, 0)),        # W_ih (resident)
                pl.BlockSpec((Hp, 4 * Hp), lambda c: (0, 0)),       # W_hh (resident)
                pl.BlockSpec((1, 4 * Hp), lambda c: (0, 0)),        # bias (resident)
            ],
            out_specs=pl.BlockSpec((tc, B, Hp), lambda c: (c, 0, 0)),
            scratch_shapes=[
                pltpu.VMEM((B, Hp), compute_dtype),                 # h state
                pltpu.VMEM((B, Hp), jnp.float32),                   # c state
            ],
        ),
        compiler_params=pltpu.CompilerParams(
            # h/c carried in scratch across chunks -> time axis must stay serial.
            dimension_semantics=("arbitrary",),
            vmem_limit_bytes=vmem_limit,
        ),
    )(x_tm, w_ih_t, w_hh_t, b_p)

    # Crop time + hidden padding, back to batch_first.
    return jnp.transpose(out_tm[:T, :, :H], (1, 0, 2))


def _lstm_reference(x, w_ih, w_hh, b_ih, b_hh):
    """Plain-JAX reference of the same LSTM forward (for correctness check)."""
    B, T, D = x.shape
    H = w_hh.shape[1]
    h0 = jnp.zeros((B, H), jnp.float32)
    c0 = jnp.zeros((B, H), jnp.float32)

    def step(carry, x_t):
        h, c = carry
        gates = x_t @ w_ih.T + h @ w_hh.T + b_ih + b_hh
        i = jax.nn.sigmoid(gates[:, 0 * H:1 * H])
        f = jax.nn.sigmoid(gates[:, 1 * H:2 * H])
        g = jnp.tanh(gates[:, 2 * H:3 * H])
        o = jax.nn.sigmoid(gates[:, 3 * H:4 * H])
        c_new = f * c + i * g
        h_new = o * jnp.tanh(c_new)
        return (h_new, c_new), h_new

    _, hs = jax.lax.scan(step, (h0, c0), jnp.transpose(x, (1, 0, 2)))
    return jnp.transpose(hs, (1, 0, 2))


def _orthogonal(key, shape, dtype=jnp.float32):
    """Deterministic orthogonal init (like nn.init.orthogonal_)."""
    rows, cols = shape
    a = jax.random.normal(key, (max(rows, cols), min(rows, cols)), dtype)
    q, r = jnp.linalg.qr(a)
    q = q * jnp.sign(jnp.diag(r))[None, :]
    if rows < cols:
        q = q.T
    return q[:rows, :cols]


if __name__ == "__main__":
    # Small shapes consistent with the module: LSTM(input=D, hidden=H), batch_first.
    B, T, D, H = 2, 8, 32, 32
    key = jax.random.PRNGKey(0)
    k_x, k_wih, k_whh, k_bih, k_bhh, k_x2 = jax.random.split(key, 6)

    x = jax.random.normal(k_x, (B, T, D), jnp.float32)

    # Parameters (PyTorch nn.LSTM layout): orthogonal weights, uniform biases.
    w_ih = _orthogonal(k_wih, (4 * H, D))                       # weight_ih_l0
    w_hh = _orthogonal(k_whh, (4 * H, H))                       # weight_hh_l0
    bound = 1.0 / jnp.sqrt(jnp.float32(H))
    b_ih = jax.random.uniform(k_bih, (4 * H,), jnp.float32, -bound, bound)
    b_hh = jax.random.uniform(k_bhh, (4 * H,), jnp.float32, -bound, bound)

    ref = _lstm_reference(x, w_ih, w_hh, b_ih, b_hh)

    # 1) f32 weights: tight check of structure / padding / gate order / fusion.
    out_f32 = jax.block_until_ready(
        lstm_decoder_forward(x, w_ih, w_hh, b_ih, b_hh, compute_dtype=jnp.float32))
    assert out_f32.shape == (B, T, H)
    assert jnp.allclose(out_f32, ref, atol=2e-4, rtol=2e-4), "f32 mismatch vs reference"

    # 2) Default bf16 MXU path (f32 state / f32 accumulation): looser tolerance.
    out_bf16 = jax.block_until_ready(lstm_decoder_forward(x, w_ih, w_hh, b_ih, b_hh))
    assert out_bf16.shape == (B, T, H)
    assert jnp.allclose(out_bf16, ref, atol=4e-2, rtol=4e-2), "bf16 mismatch vs reference"

    # 3) Multi-chunk grid + time padding (T not a multiple of t_chunk): checks the
    #    h/c carry across grid iterations and the resident-weight reuse.
    T2 = 20
    x2 = jax.random.normal(k_x2, (B, T2, D), jnp.float32)
    ref2 = _lstm_reference(x2, w_ih, w_hh, b_ih, b_hh)
    out2 = jax.block_until_ready(
        lstm_decoder_forward(x2, w_ih, w_hh, b_ih, b_hh,
                             compute_dtype=jnp.float32, t_chunk=8))
    assert out2.shape == (B, T2, H)
    assert jnp.allclose(out2, ref2, atol=2e-4, rtol=2e-4), "multi-chunk mismatch"

    print("KERNEL_OK")
</pallas_src>

<mosaic_0001>
module attributes {stable_mosaic.version = 11 : i64} {
  func.func @_lstm_fused_kernel(%arg0: i32, %arg1: memref<8x2x32xf32, #tpu.memory_space<vmem>>, %arg2: memref<32x512xf32, #tpu.memory_space<vmem>>, %arg3: memref<128x512xf32, #tpu.memory_space<vmem>>, %arg4: memref<1x512xf32, #tpu.memory_space<vmem>>, %arg5: memref<8x2x128xf32, #tpu.memory_space<vmem>>, %arg6: memref<2x128xf32, #tpu.memory_space<vmem>>, %arg7: memref<2x128xf32, #tpu.memory_space<vmem>>) attributes {dimension_semantics = [#tpu.dimension_semantics<arbitrary>], iteration_bounds = array<i64: 1>, scalar_prefetch = 0 : i64, scratch_operands = 2 : i64, tpu.core_type = #tpu.core_type<tc>, window_params = [{transform_indices = @transform_0, window_bounds = array<i64: 8, 2, 32>}, {pipeline_mode = #tpu.pipeline_mode<synchronous>, transform_indices = @transform_1, window_bounds = array<i64: 32, 512>}, {pipeline_mode = #tpu.pipeline_mode<synchronous>, transform_indices = @transform_2, window_bounds = array<i64: 128, 512>}, {pipeline_mode = #tpu.pipeline_mode<synchronous>, transform_indices = @transform_3, window_bounds = array<i64: 1, 512>}, {transform_indices = @transform_4, window_bounds = array<i64: 8, 2, 128>}]} {
    %c0_i32 = arith.constant 0 : i32
    %0 = arith.cmpi eq, %arg0, %c0_i32 : i32
    %1 = arith.extui %0 : i1 to i32
    %c0_i32_0 = arith.constant 0 : i32
    %2 = arith.cmpi ne, %1, %c0_i32_0 : i32
    scf.if %2 {
      %cst_86 = arith.constant 0.000000e+00 : f32
      %306 = vector.broadcast %cst_86 : f32 to vector<2x128xf32>
      %c0_87 = arith.constant 0 : index
      %c0_88 = arith.constant 0 : index
      %307 = vector.load %arg6[%c0_87, %c0_88] : memref<2x128xf32, #tpu.memory_space<vmem>>, vector<2x128xf32>
      tpu.vector_store %arg6[%c0_87, %c0_88], %306 {strides = array<i32>} : memref<2x128xf32, #tpu.memory_space<vmem>>, vector<2x128xf32>,
      %cst_89 = arith.constant 0.000000e+00 : f32
      %308 = vector.broadcast %cst_89 : f32 to vector<2x128xf32>
      %c0_90 = arith.constant 0 : index
      %c0_91 = arith.constant 0 : index
      %309 = vector.load %arg7[%c0_90, %c0_91] : memref<2x128xf32, #tpu.memory_space<vmem>>, vector<2x128xf32>
      tpu.vector_store %arg7[%c0_90, %c0_91], %308 {strides = array<i32>} : memref<2x128xf32, #tpu.memory_space<vmem>>, vector<2x128xf32>,
    } else {
    }
    %c0 = arith.constant 0 : index
    %c0_1 = arith.constant 0 : index
    %3 = vector.load %arg2[%c0, %c0_1] : memref<32x512xf32, #tpu.memory_space<vmem>>, vector<32x512xf32>
    %c0_2 = arith.constant 0 : index
    %c0_3 = arith.constant 0 : index
    %4 = vector.load %arg3[%c0_2, %c0_3] : memref<128x512xf32, #tpu.memory_space<vmem>>, vector<128x512xf32>
    %c0_4 = arith.constant 0 : index
    %c0_5 = arith.constant 0 : index
    %5 = vector.load %arg4[%c0_4, %c0_5] : memref<1x512xf32, #tpu.memory_space<vmem>>, vector<1x512xf32>
    %c0_6 = arith.constant 0 : index
    %c0_7 = arith.constant 0 : index
    %6 = vector.load %arg6[%c0_6, %c0_7] : memref<2x128xf32, #tpu.memory_space<vmem>>, vector<2x128xf32>
    %c0_8 = arith.constant 0 : index
    %c0_9 = arith.constant 0 : index
    %7 = vector.load %arg7[%c0_8, %c0_9] : memref<2x128xf32, #tpu.memory_space<vmem>>, vector<2x128xf32>
    %c0_i32_10 = arith.constant 0 : i32
    %8 = arith.index_cast %c0_i32_10 : i32 to index
    %c0_11 = arith.constant 0 : index
    %c0_12 = arith.constant 0 : index
    %9 = vector.load %arg1[%8, %c0_11, %c0_12] : memref<8x2x32xf32, #tpu.memory_space<vmem>>, vector<1x2x32xf32>
    %10 = vector.shape_cast %9 : vector<1x2x32xf32> to vector<2x32xf32>
    %cst = arith.constant dense<0.000000e+00> : vector<2x512xf32>
    %11 = tpu.matmul %10, %3, %cst {dimension_numbers = #tpu.dot_dimension_numbers<[1], [0], [0], [1], [0, 0, 1, 1], [], []>} : vector<2x32xf32>, vector<32x512xf32>, vector<2x512xf32> -> vector<2x512xf32>
    %12 = vector.broadcast %5 : vector<1x512xf32> to vector<2x512xf32>
    %13 = arith.addf %11, %12 : vector<2x512xf32>
    %cst_13 = arith.constant dense<0.000000e+00> : vector<2x512xf32>
    %14 = tpu.matmul %6, %4, %cst_13 {dimension_numbers = #tpu.dot_dimension_numbers<[1], [0], [0], [1], [0, 0, 1, 1], [], []>} : vector<2x128xf32>, vector<128x512xf32>, vector<2x512xf32> -> vector<2x512xf32>
    %15 = arith.addf %13, %14 : vector<2x512xf32>
    %16 = vector.extract_strided_slice %15 {offsets = [0, 0], sizes = [2, 128], strides = [1, 1]} : vector<2x512xf32> to vector<2x128xf32>
    %17 = arith.negf %16 : vector<2x128xf32>
    %18 = math.exp %17 : vector<2x128xf32>
    %cst_14 = arith.constant 1.000000e+00 : f32
    %19 = vector.broadcast %cst_14 : f32 to vector<2x128xf32>
    %20 = arith.addf %19, %18 : vector<2x128xf32>
    %21 = arith.divf %19, %20 : vector<2x128xf32>
    %22 = vector.extract_strided_slice %15 {offsets = [0, 128], sizes = [2, 128], strides = [1, 1]} : vector<2x512xf32> to vector<2x128xf32>
    %23 = arith.negf %22 : vector<2x128xf32>
    %24 = math.exp %23 : vector<2x128xf32>
    %cst_15 = arith.constant 1.000000e+00 : f32
    %25 = vector.broadcast %cst_15 : f32 to vector<2x128xf32>
    %26 = arith.addf %25, %24 : vector<2x128xf32>
    %27 = arith.divf %25, %26 : vector<2x128xf32>
    %28 = vector.extract_strided_slice %15 {offsets = [0, 256], sizes = [2, 128], strides = [1, 1]} : vector<2x512xf32> to vector<2x128xf32>
    %29 = math.tanh %28 : vector<2x128xf32>
    %30 = vector.extract_strided_slice %15 {offsets = [0, 384], sizes = [2, 128], strides = [1, 1]} : vector<2x512xf32> to vector<2x128xf32>
    %31 = arith.negf %30 : vector<2x128xf32>
    %32 = math.exp %31 : vector<2x128xf32>
    %cst_16 = arith.constant 1.000000e+00 : f32
    %33 = vector.broadcast %cst_16 : f32 to vector<2x128xf32>
    %34 = arith.addf %33, %32 : vector<2x128xf32>
    %35 = arith.divf %33, %34 : vector<2x128xf32>
    %36 = arith.mulf %27, %7 : vector<2x128xf32>
    %37 = arith.mulf %21, %29 : vector<2x128xf32>
    %38 = arith.addf %36, %37 : vector<2x128xf32>
    %39 = math.tanh %38 : vector<2x128xf32>
    %40 = arith.mulf %35, %39 : vector<2x128xf32>
    %41 = arith.index_cast %c0_i32_10 : i32 to index
    %c0_17 = arith.constant 0 : index
    %c0_18 = arith.constant 0 : index
    %42 = vector.load %arg5[%41, %c0_17, %c0_18] : memref<8x2x128xf32, #tpu.memory_space<vmem>>, vector<1x2x128xf32>
    %43 = vector.shape_cast %42 : vector<1x2x128xf32> to vector<2x128xf32>
    %44 = vector.shape_cast %40 : vector<2x128xf32> to vector<1x2x128xf32>
    tpu.vector_store %arg5[%41, %c0_17, %c0_18], %44 {strides = array<i32>} : memref<8x2x128xf32, #tpu.memory_space<vmem>>, vector<1x2x128xf32>,
    %c1_i32 = arith.constant 1 : i32
    %45 = arith.index_cast %c1_i32 : i32 to index
    %c0_19 = arith.constant 0 : index
    %c0_20 = arith.constant 0 : index
    %46 = vector.load %arg1[%45, %c0_19, %c0_20] : memref<8x2x32xf32, #tpu.memory_space<vmem>>, vector<1x2x32xf32>
    %47 = vector.shape_cast %46 : vector<1x2x32xf32> to vector<2x32xf32>
    %cst_21 = arith.constant dense<0.000000e+00> : vector<2x512xf32>
    %48 = tpu.matmul %47, %3, %cst_21 {dimension_numbers = #tpu.dot_dimension_numbers<[1], [0], [0], [1], [0, 0, 1, 1], [], []>} : vector<2x32xf32>, vector<32x512xf32>, vector<2x512xf32> -> vector<2x512xf32>
    %49 = vector.broadcast %5 : vector<1x512xf32> to vector<2x512xf32>
    %50 = arith.addf %48, %49 : vector<2x512xf32>
    %cst_22 = arith.constant dense<0.000000e+00> : vector<2x512xf32>
    %51 = tpu.matmul %40, %4, %cst_22 {dimension_numbers = #tpu.dot_dimension_numbers<[1], [0], [0], [1], [0, 0, 1, 1], [], []>} : vector<2x128xf32>, vector<128x512xf32>, vector<2x512xf32> -> vector<2x512xf32>
    %52 = arith.addf %50, %51 : vector<2x512xf32>
    %53 = vector.extract_strided_slice %52 {offsets = [0, 0], sizes = [2, 128], strides = [1, 1]} : vector<2x512xf32> to vector<2x128xf32>
    %54 = arith.negf %53 : vector<2x128xf32>
    %55 = math.exp %54 : vector<2x128xf32>
    %cst_23 = arith.constant 1.000000e+00 : f32
    %56 = vector.broadcast %cst_23 : f32 to vector<2x128xf32>
    %57 = arith.addf %56, %55 : vector<2x128xf32>
    %58 = arith.divf %56, %57 : vector<2x128xf32>
    %59 = vector.extract_strided_slice %52 {offsets = [0, 128], sizes = [2, 128], strides = [1, 1]} : vector<2x512xf32> to vector<2x128xf32>
    %60 = arith.negf %59 : vector<2x128xf32>
    %61 = math.exp %60 : vector<2x128xf32>
    %cst_24 = arith.constant 1.000000e+00 : f32
    %62 = vector.broadcast %cst_24 : f32 to vector<2x128xf32>
    %63 = arith.addf %62, %61 : vector<2x128xf32>
    %64 = arith.divf %62, %63 : vector<2x128xf32>
    %65 = vector.extract_strided_slice %52 {offsets = [0, 256], sizes = [2, 128], strides = [1, 1]} : vector<2x512xf32> to vector<2x128xf32>
    %66 = math.tanh %65 : vector<2x128xf32>
    %67 = vector.extract_strided_slice %52 {offsets = [0, 384], sizes = [2, 128], strides = [1, 1]} : vector<2x512xf32> to vector<2x128xf32>
    %68 = arith.negf %67 : vector<2x128xf32>
    %69 = math.exp %68 : vector<2x128xf32>
    %cst_25 = arith.constant 1.000000e+00 : f32
    %70 = vector.broadcast %cst_25 : f32 to vector<2x128xf32>
    %71 = arith.addf %70, %69 : vector<2x128xf32>
    %72 = arith.divf %70, %71 : vector<2x128xf32>
    %73 = arith.mulf %64, %38 : vector<2x128xf32>
    %74 = arith.mulf %58, %66 : vector<2x128xf32>
    %75 = arith.addf %73, %74 : vector<2x128xf32>
    %76 = math.tanh %75 : vector<2x128xf32>
    %77 = arith.mulf %72, %76 : vector<2x128xf32>
    %78 = arith.index_cast %c1_i32 : i32 to index
    %c0_26 = arith.constant 0 : index
    %c0_27 = arith.constant 0 : index
    %79 = vector.load %arg5[%78, %c0_26, %c0_27] : memref<8x2x128xf32, #tpu.memory_space<vmem>>, vector<1x2x128xf32>
    %80 = vector.shape_cast %79 : vector<1x2x128xf32> to vector<2x128xf32>
    %81 = vector.shape_cast %77 : vector<2x128xf32> to vector<1x2x128xf32>
    tpu.vector_store %arg5[%78, %c0_26, %c0_27], %81 {strides = array<i32>} : memref<8x2x128xf32, #tpu.memory_space<vmem>>, vector<1x2x128xf32>,
    %c2_i32 = arith.constant 2 : i32
    %82 = arith.index_cast %c2_i32 : i32 to index
    %c0_28 = arith.constant 0 : index
    %c0_29 = arith.constant 0 : index
    %83 = vector.load %arg1[%82, %c0_28, %c0_29] : memref<8x2x32xf32, #tpu.memory_space<vmem>>, vector<1x2x32xf32>
    %84 = vector.shape_cast %83 : vector<1x2x32xf32> to vector<2x32xf32>
    %cst_30 = arith.constant dense<0.000000e+00> : vector<2x512xf32>
    %85 = tpu.matmul %84, %3, %cst_30 {dimension_numbers = #tpu.dot_dimension_numbers<[1], [0], [0], [1], [0, 0, 1, 1], [], []>} : vector<2x32xf32>, vector<32x512xf32>, vector<2x512xf32> -> vector<2x512xf32>
    %86 = vector.broadcast %5 : vector<1x512xf32> to vector<2x512xf32>
    %87 = arith.addf %85, %86 : vector<2x512xf32>
    %cst_31 = arith.constant dense<0.000000e+00> : vector<2x512xf32>
    %88 = tpu.matmul %77, %4, %cst_31 {dimension_numbers = #tpu.dot_dimension_numbers<[1], [0], [0], [1], [0, 0, 1, 1], [], []>} : vector<2x128xf32>, vector<128x512xf32>, vector<2x512xf32> -> vector<2x512xf32>
    %89 = arith.addf %87, %88 : vector<2x512xf32>
    %90 = vector.extract_strided_slice %89 {offsets = [0, 0], sizes = [2, 128], strides = [1, 1]} : vector<2x512xf32> to vector<2x128xf32>
    %91 = arith.negf %90 : vector<2x128xf32>
    %92 = math.exp %91 : vector<2x128xf32>
    %cst_32 = arith.constant 1.000000e+00 : f32
    %93 = vector.broadcast %cst_32 : f32 to vector<2x128xf32>
    %94 = arith.addf %93, %92 : vector<2x128xf32>
    %95 = arith.divf %93, %94 : vector<2x128xf32>
    %96 = vector.extract_strided_slice %89 {offsets = [0, 128], sizes = [2, 128], strides = [1, 1]} : vector<2x512xf32> to vector<2x128xf32>
    %97 = arith.negf %96 : vector<2x128xf32>
    %98 = math.exp %97 : vector<2x128xf32>
    %cst_33 = arith.constant 1.000000e+00 : f32
    %99 = vector.broadcast %cst_33 : f32 to vector<2x128xf32>
    %100 = arith.addf %99, %98 : vector<2x128xf32>
    %101 = arith.divf %99, %100 : vector<2x128xf32>
    %102 = vector.extract_strided_slice %89 {offsets = [0, 256], sizes = [2, 128], strides = [1, 1]} : vector<2x512xf32> to vector<2x128xf32>
    %103 = math.tanh %102 : vector<2x128xf32>
    %104 = vector.extract_strided_slice %89 {offsets = [0, 384], sizes = [2, 128], strides = [1, 1]} : vector<2x512xf32> to vector<2x128xf32>
    %105 = arith.negf %104 : vector<2x128xf32>
    %106 = math.exp %105 : vector<2x128xf32>
    %cst_34 = arith.constant 1.000000e+00 : f32
    %107 = vector.broadcast %cst_34 : f32 to vector<2x128xf32>
    %108 = arith.addf %107, %106 : vector<2x128xf32>
    %109 = arith.divf %107, %108 : vector<2x128xf32>
    %110 = arith.mulf %101, %75 : vector<2x128xf32>
    %111 = arith.mulf %95, %103 : vector<2x128xf32>
    %112 = arith.addf %110, %111 : vector<2x128xf32>
    %113 = math.tanh %112 : vector<2x128xf32>
    %114 = arith.mulf %109, %113 : vector<2x128xf32>
    %115 = arith.index_cast %c2_i32 : i32 to index
    %c0_35 = arith.constant 0 : index
    %c0_36 = arith.constant 0 : index
    %116 = vector.load %arg5[%115, %c0_35, %c0_36] : memref<8x2x128xf32, #tpu.memory_space<vmem>>, vector<1x2x128xf32>
    %117 = vector.shape_cast %116 : vector<1x2x128xf32> to vector<2x128xf32>
    %118 = vector.shape_cast %114 : vector<2x128xf32> to vector<1x2x128xf32>
    tpu.vector_store %arg5[%115, %c0_35, %c0_36], %118 {strides = array<i32>} : memref<8x2x128xf32, #tpu.memory_space<vmem>>, vector<1x2x128xf32>,
    %c3_i32 = arith.constant 3 : i32
    %119 = arith.index_cast %c3_i32 : i32 to index
    %c0_37 = arith.constant 0 : index
    %c0_38 = arith.constant 0 : index
    %120 = vector.load %arg1[%119, %c0_37, %c0_38] : memref<8x2x32xf32, #tpu.memory_space<vmem>>, vector<1x2x32xf32>
    %121 = vector.shape_cast %120 : vector<1x2x32xf32> to vector<2x32xf32>
    %cst_39 = arith.constant dense<0.000000e+00> : vector<2x512xf32>
    %122 = tpu.matmul %121, %3, %cst_39 {dimension_numbers = #tpu.dot_dimension_numbers<[1], [0], [0], [1], [0, 0, 1, 1], [], []>} : vector<2x32xf32>, vector<32x512xf32>, vector<2x512xf32> -> vector<2x512xf32>
    %123 = vector.broadcast %5 : vector<1x512xf32> to vector<2x512xf32>
    %124 = arith.addf %122, %123 : vector<2x512xf32>
    %cst_40 = arith.constant dense<0.000000e+00> : vector<2x512xf32>
    %125 = tpu.matmul %114, %4, %cst_40 {dimension_numbers = #tpu.dot_dimension_numbers<[1], [0], [0], [1], [0, 0, 1, 1], [], []>} : vector<2x128xf32>, vector<128x512xf32>, vector<2x512xf32> -> vector<2x512xf32>
    %126 = arith.addf %124, %125 : vector<2x512xf32>
    %127 = vector.extract_strided_slice %126 {offsets = [0, 0], sizes = [2, 128], strides = [1, 1]} : vector<2x512xf32> to vector<2x128xf32>
    %128 = arith.negf %127 : vector<2x128xf32>
    %129 = math.exp %128 : vector<2x128xf32>
    %cst_41 = arith.constant 1.000000e+00 : f32
    %130 = vector.broadcast %cst_41 : f32 to vector<2x128xf32>
    %131 = arith.addf %130, %129 : vector<2x128xf32>
    %132 = arith.divf %130, %131 : vector<2x128xf32>
    %133 = vector.extract_strided_slice %126 {offsets = [0, 128], sizes = [2, 128], strides = [1, 1]} : vector<2x512xf32> to vector<2x128xf32>
    %134 = arith.negf %133 : vector<2x128xf32>
    %135 = math.exp %134 : vector<2x128xf32>
    %cst_42 = arith.constant 1.000000e+00 : f32
    %136 = vector.broadcast %cst_42 : f32 to vector<2x128xf32>
    %137 = arith.addf %136, %135 : vector<2x128xf32>
    %138 = arith.divf %136, %137 : vector<2x128xf32>
    %139 = vector.extract_strided_slice %126 {offsets = [0, 256], sizes = [2, 128], strides = [1, 1]} : vector<2x512xf32> to vector<2x128xf32>
    %140 = math.tanh %139 : vector<2x128xf32>
    %141 = vector.extract_strided_slice %126 {offsets = [0, 384], sizes = [2, 128], strides = [1, 1]} : vector<2x512xf32> to vector<2x128xf32>
    %142 = arith.negf %141 : vector<2x128xf32>
    %143 = math.exp %142 : vector<2x128xf32>
    %cst_43 = arith.constant 1.000000e+00 : f32
    %144 = vector.broadcast %cst_43 : f32 to vector<2x128xf32>
    %145 = arith.addf %144, %143 : vector<2x128xf32>
    %146 = arith.divf %144, %145 : vector<2x128xf32>
    %147 = arith.mulf %138, %112 : vector<2x128xf32>
    %148 = arith.mulf %132, %140 : vector<2x128xf32>
    %149 = arith.addf %147, %148 : vector<2x128xf32>
    %150 = math.tanh %149 : vector<2x128xf32>
    %151 = arith.mulf %146, %150 : vector<2x128xf32>
    %152 = arith.index_cast %c3_i32 : i32 to index
    %c0_44 = arith.constant 0 : index
    %c0_45 = arith.constant 0 : index
    %153 = vector.load %arg5[%152, %c0_44, %c0_45] : memref<8x2x128xf32, #tpu.memory_space<vmem>>, vector<1x2x128xf32>
    %154 = vector.shape_cast %153 : vector<1x2x128xf32> to vector<2x128xf32>
    %155 = vector.shape_cast %151 : vector<2x128xf32> to vector<1x2x128xf32>
    tpu.vector_store %arg5[%152, %c0_44, %c0_45], %155 {strides = array<i32>} : memref<8x2x128xf32, #tpu.memory_space<vmem>>, vector<1x2x128xf32>,
    %c4_i32 = arith.constant 4 : i32
    %156 = arith.index_cast %c4_i32 : i32 to index
    %c0_46 = arith.constant 0 : index
    %c0_47 = arith.constant 0 : index
    %157 = vector.load %arg1[%156, %c0_46, %c0_47] : memref<8x2x32xf32, #tpu.memory_space<vmem>>, vector<1x2x32xf32>
    %158 = vector.shape_cast %157 : vector<1x2x32xf32> to vector<2x32xf32>
    %cst_48 = arith.constant dense<0.000000e+00> : vector<2x512xf32>
    %159 = tpu.matmul %158, %3, %cst_48 {dimension_numbers = #tpu.dot_dimension_numbers<[1], [0], [0], [1], [0, 0, 1, 1], [], []>} : vector<2x32xf32>, vector<32x512xf32>, vector<2x512xf32> -> vector<2x512xf32>
    %160 = vector.broadcast %5 : vector<1x512xf32> to vector<2x512xf32>
    %161 = arith.addf %159, %160 : vector<2x512xf32>
    %cst_49 = arith.constant dense<0.000000e+00> : vector<2x512xf32>
    %162 = tpu.matmul %151, %4, %cst_49 {dimension_numbers = #tpu.dot_dimension_numbers<[1], [0], [0], [1], [0, 0, 1, 1], [], []>} : vector<2x128xf32>, vector<128x512xf32>, vector<2x512xf32> -> vector<2x512xf32>
    %163 = arith.addf %161, %162 : vector<2x512xf32>
    %164 = vector.extract_strided_slice %163 {offsets = [0, 0], sizes = [2, 128], strides = [1, 1]} : vector<2x512xf32> to vector<2x128xf32>
    %165 = arith.negf %164 : vector<2x128xf32>
    %166 = math.exp %165 : vector<2x128xf32>
    %cst_50 = arith.constant 1.000000e+00 : f32
    %167 = vector.broadcast %cst_50 : f32 to vector<2x128xf32>
    %168 = arith.addf %167, %166 : vector<2x128xf32>
    %169 = arith.divf %167, %168 : vector<2x128xf32>
    %170 = vector.extract_strided_slice %163 {offsets = [0, 128], sizes = [2, 128], strides = [1, 1]} : vector<2x512xf32> to vector<2x128xf32>
    %171 = arith.negf %170 : vector<2x128xf32>
    %172 = math.exp %171 : vector<2x128xf32>
    %cst_51 = arith.constant 1.000000e+00 : f32
    %173 = vector.broadcast %cst_51 : f32 to vector<2x128xf32>
    %174 = arith.addf %173, %172 : vector<2x128xf32>
    %175 = arith.divf %173, %174 : vector<2x128xf32>
    %176 = vector.extract_strided_slice %163 {offsets = [0, 256], sizes = [2, 128], strides = [1, 1]} : vector<2x512xf32> to vector<2x128xf32>
    %177 = math.tanh %176 : vector<2x128xf32>
    %178 = vector.extract_strided_slice %163 {offsets = [0, 384], sizes = [2, 128], strides = [1, 1]} : vector<2x512xf32> to vector<2x128xf32>
    %179 = arith.negf %178 : vector<2x128xf32>
    %180 = math.exp %179 : vector<2x128xf32>
    %cst_52 = arith.constant 1.000000e+00 : f32
    %181 = vector.broadcast %cst_52 : f32 to vector<2x128xf32>
    %182 = arith.addf %181, %180 : vector<2x128xf32>
    %183 = arith.divf %181, %182 : vector<2x128xf32>
    %184 = arith.mulf %175, %149 : vector<2x128xf32>
    %185 = arith.mulf %169, %177 : vector<2x128xf32>
    %186 = arith.addf %184, %185 : vector<2x128xf32>
    %187 = math.tanh %186 : vector<2x128xf32>
    %188 = arith.mulf %183, %187 : vector<2x128xf32>
    %189 = arith.index_cast %c4_i32 : i32 to index
    %c0_53 = arith.constant 0 : index
    %c0_54 = arith.constant 0 : index
    %190 = vector.load %arg5[%189, %c0_53, %c0_54] : memref<8x2x128xf32, #tpu.memory_space<vmem>>, vector<1x2x128xf32>
    %191 = vector.shape_cast %190 : vector<1x2x128xf32> to vector<2x128xf32>
    %192 = vector.shape_cast %188 : vector<2x128xf32> to vector<1x2x128xf32>
    tpu.vector_store %arg5[%189, %c0_53, %c0_54], %192 {strides = array<i32>} : memref<8x2x128xf32, #tpu.memory_space<vmem>>, vector<1x2x128xf32>,
    %c5_i32 = arith.constant 5 : i32
    %193 = arith.index_cast %c5_i32 : i32 to index
    %c0_55 = arith.constant 0 : index
    %c0_56 = arith.constant 0 : index
    %194 = vector.load %arg1[%193, %c0_55, %c0_56] : memref<8x2x32xf32, #tpu.memory_space<vmem>>, vector<1x2x32xf32>
    %195 = vector.shape_cast %194 : vector<1x2x32xf32> to vector<2x32xf32>
    %cst_57 = arith.constant dense<0.000000e+00> : vector<2x512xf32>
    %196 = tpu.matmul %195, %3, %cst_57 {dimension_numbers = #tpu.dot_dimension_numbers<[1], [0], [0], [1], [0, 0, 1, 1], [], []>} : vector<2x32xf32>, vector<32x512xf32>, vector<2x512xf32> -> vector<2x512xf32>
    %197 = vector.broadcast %5 : vector<1x512xf32> to vector<2x512xf32>
    %198 = arith.addf %196, %197 : vector<2x512xf32>
    %cst_58 = arith.constant dense<0.000000e+00> : vector<2x512xf32>
    %199 = tpu.matmul %188, %4, %cst_58 {dimension_numbers = #tpu.dot_dimension_numbers<[1], [0], [0], [1], [0, 0, 1, 1], [], []>} : vector<2x128xf32>, vector<128x512xf32>, vector<2x512xf32> -> vector<2x512xf32>
    %200 = arith.addf %198, %199 : vector<2x512xf32>
    %201 = vector.extract_strided_slice %200 {offsets = [0, 0], sizes = [2, 128], strides = [1, 1]} : vector<2x512xf32> to vector<2x128xf32>
    %202 = arith.negf %201 : vector<2x128xf32>
    %203 = math.exp %202 : vector<2x128xf32>
    %cst_59 = arith.constant 1.000000e+00 : f32
    %204 = vector.broadcast %cst_59 : f32 to vector<2x128xf32>
    %205 = arith.addf %204, %203 : vector<2x128xf32>
    %206 = arith.divf %204, %205 : vector<2x128xf32>
    %207 = vector.extract_strided_slice %200 {offsets = [0, 128], sizes = [2, 128], strides = [1, 1]} : vector<2x512xf32> to vector<2x128xf32>
    %208 = arith.negf %207 : vector<2x128xf32>
    %209 = math.exp %208 : vector<2x128xf32>
    %cst_60 = arith.constant 1.000000e+00 : f32
    %210 = vector.broadcast %cst_60 : f32 to vector<2x128xf32>
    %211 = arith.addf %210, %209 : vector<2x128xf32>
    %212 = arith.divf %210, %211 : vector<2x128xf32>
    %213 = vector.extract_strided_slice %200 {offsets = [0, 256], sizes = [2, 128], strides = [1, 1]} : vector<2x512xf32> to vector<2x128xf32>
    %214 = math.tanh %213 : vector<2x128xf32>
    %215 = vector.extract_strided_slice %200 {offsets = [0, 384], sizes = [2, 128], strides = [1, 1]} : vector<2x512xf32> to vector<2x128xf32>
    %216 = arith.negf %215 : vector<2x128xf32>
    %217 = math.exp %216 : vector<2x128xf32>
    %cst_61 = arith.constant 1.000000e+00 : f32
    %218 = vector.broadcast %cst_61 : f32 to vector<2x128xf32>
    %219 = arith.addf %218, %217 : vector<2x128xf32>
    %220 = arith.divf %218, %219 : vector<2x128xf32>
    %221 = arith.mulf %212, %186 : vector<2x128xf32>
    %222 = arith.mulf %206, %214 : vector<2x128xf32>
    %223 = arith.addf %221, %222 : vector<2x128xf32>
    %224 = math.tanh %223 : vector<2x128xf32>
    %225 = arith.mulf %220, %224 : vector<2x128xf32>
    %226 = arith.index_cast %c5_i32 : i32 to index
    %c0_62 = arith.constant 0 : index
    %c0_63 = arith.constant 0 : index
    %227 = vector.load %arg5[%226, %c0_62, %c0_63] : memref<8x2x128xf32, #tpu.memory_space<vmem>>, vector<1x2x128xf32>
    %228 = vector.shape_cast %227 : vector<1x2x128xf32> to vector<2x128xf32>
    %229 = vector.shape_cast %225 : vector<2x128xf32> to vector<1x2x128xf32>
    tpu.vector_store %arg5[%226, %c0_62, %c0_63], %229 {strides = array<i32>} : memref<8x2x128xf32, #tpu.memory_space<vmem>>, vector<1x2x128xf32>,
    %c6_i32 = arith.constant 6 : i32
    %230 = arith.index_cast %c6_i32 : i32 to index
    %c0_64 = arith.constant 0 : index
    %c0_65 = arith.constant 0 : index
    %231 = vector.load %arg1[%230, %c0_64, %c0_65] : memref<8x2x32xf32, #tpu.memory_space<vmem>>, vector<1x2x32xf32>
    %232 = vector.shape_cast %231 : vector<1x2x32xf32> to vector<2x32xf32>
    %cst_66 = arith.constant dense<0.000000e+00> : vector<2x512xf32>
    %233 = tpu.matmul %232, %3, %cst_66 {dimension_numbers = #tpu.dot_dimension_numbers<[1], [0], [0], [1], [0, 0, 1, 1], [], []>} : vector<2x32xf32>, vector<32x512xf32>, vector<2x512xf32> -> vector<2x512xf32>
    %234 = vector.broadcast %5 : vector<1x512xf32> to vector<2x512xf32>
    %235 = arith.addf %233, %234 : vector<2x512xf32>
    %cst_67 = arith.constant dense<0.000000e+00> : vector<2x512xf32>
    %236 = tpu.matmul %225, %4, %cst_67 {dimension_numbers = #tpu.dot_dimension_numbers<[1], [0], [0], [1], [0, 0, 1, 1], [], []>} : vector<2x128xf32>, vector<128x512xf32>, vector<2x512xf32> -> vector<2x512xf32>
    %237 = arith.addf %235, %236 : vector<2x512xf32>
    %238 = vector.extract_strided_slice %237 {offsets = [0, 0], sizes = [2, 128], strides = [1, 1]} : vector<2x512xf32> to vector<2x128xf32>
    %239 = arith.negf %238 : vector<2x128xf32>
    %240 = math.exp %239 : vector<2x128xf32>
    %cst_68 = arith.constant 1.000000e+00 : f32
    %241 = vector.broadcast %cst_68 : f32 to vector<2x128xf32>
    %242 = arith.addf %241, %240 : vector<2x128xf32>
    %243 = arith.divf %241, %242 : vector<2x128xf32>
    %244 = vector.extract_strided_slice %237 {offsets = [0, 128], sizes = [2, 128], strides = [1, 1]} : vector<2x512xf32> to vector<2x128xf32>
    %245 = arith.negf %244 : vector<2x128xf32>
    %246 = math.exp %245 : vector<2x128xf32>
    %cst_69 = arith.constant 1.000000e+00 : f32
    %247 = vector.broadcast %cst_69 : f32 to vector<2x128xf32>
    %248 = arith.addf %247, %246 : vector<2x128xf32>
    %249 = arith.divf %247, %248 : vector<2x128xf32>
    %250 = vector.extract_strided_slice %237 {offsets = [0, 256], sizes = [2, 128], strides = [1, 1]} : vector<2x512xf32> to vector<2x128xf32>
    %251 = math.tanh %250 : vector<2x128xf32>
    %252 = vector.extract_strided_slice %237 {offsets = [0, 384], sizes = [2, 128], strides = [1, 1]} : vector<2x512xf32> to vector<2x128xf32>
    %253 = arith.negf %252 : vector<2x128xf32>
    %254 = math.exp %253 : vector<2x128xf32>
    %cst_70 = arith.constant 1.000000e+00 : f32
    %255 = vector.broadcast %cst_70 : f32 to vector<2x128xf32>
    %256 = arith.addf %255, %254 : vector<2x128xf32>
    %257 = arith.divf %255, %256 : vector<2x128xf32>
    %258 = arith.mulf %249, %223 : vector<2x128xf32>
    %259 = arith.mulf %243, %251 : vector<2x128xf32>
    %260 = arith.addf %258, %259 : vector<2x128xf32>
    %261 = math.tanh %260 : vector<2x128xf32>
    %262 = arith.mulf %257, %261 : vector<2x128xf32>
    %263 = arith.index_cast %c6_i32 : i32 to index
    %c0_71 = arith.constant 0 : index
    %c0_72 = arith.constant 0 : index
    %264 = vector.load %arg5[%263, %c0_71, %c0_72] : memref<8x2x128xf32, #tpu.memory_space<vmem>>, vector<1x2x128xf32>
    %265 = vector.shape_cast %264 : vector<1x2x128xf32> to vector<2x128xf32>
    %266 = vector.shape_cast %262 : vector<2x128xf32> to vector<1x2x128xf32>
    tpu.vector_store %arg5[%263, %c0_71, %c0_72], %266 {strides = array<i32>} : memref<8x2x128xf32, #tpu.memory_space<vmem>>, vector<1x2x128xf32>,
    %c7_i32 = arith.constant 7 : i32
    %267 = arith.index_cast %c7_i32 : i32 to index
    %c0_73 = arith.constant 0 : index
    %c0_74 = arith.constant 0 : index
    %268 = vector.load %arg1[%267, %c0_73, %c0_74] : memref<8x2x32xf32, #tpu.memory_space<vmem>>, vector<1x2x32xf32>
    %269 = vector.shape_cast %268 : vector<1x2x32xf32> to vector<2x32xf32>
    %cst_75 = arith.constant dense<0.000000e+00> : vector<2x512xf32>
    %270 = tpu.matmul %269, %3, %cst_75 {dimension_numbers = #tpu.dot_dimension_numbers<[1], [0], [0], [1], [0, 0, 1, 1], [], []>} : vector<2x32xf32>, vector<32x512xf32>, vector<2x512xf32> -> vector<2x512xf32>
    %271 = vector.broadcast %5 : vector<1x512xf32> to vector<2x512xf32>
    %272 = arith.addf %270, %271 : vector<2x512xf32>
    %cst_76 = arith.constant dense<0.000000e+00> : vector<2x512xf32>
    %273 = tpu.matmul %262, %4, %cst_76 {dimension_numbers = #tpu.dot_dimension_numbers<[1], [0], [0], [1], [0, 0, 1, 1], [], []>} : vector<2x128xf32>, vector<128x512xf32>, vector<2x512xf32> -> vector<2x512xf32>
    %274 = arith.addf %272, %273 : vector<2x512xf32>
    %275 = vector.extract_strided_slice %274 {offsets = [0, 0], sizes = [2, 128], strides = [1, 1]} : vector<2x512xf32> to vector<2x128xf32>
    %276 = arith.negf %275 : vector<2x128xf32>
    %277 = math.exp %276 : vector<2x128xf32>
    %cst_77 = arith.constant 1.000000e+00 : f32
    %278 = vector.broadcast %cst_77 : f32 to vector<2x128xf32>
    %279 = arith.addf %278, %277 : vector<2x128xf32>
    %280 = arith.divf %278, %279 : vector<2x128xf32>
    %281 = vector.extract_strided_slice %274 {offsets = [0, 128], sizes = [2, 128], strides = [1, 1]} : vector<2x512xf32> to vector<2x128xf32>
    %282 = arith.negf %281 : vector<2x128xf32>
    %283 = math.exp %282 : vector<2x128xf32>
    %cst_78 = arith.constant 1.000000e+00 : f32
    %284 = vector.broadcast %cst_78 : f32 to vector<2x128xf32>
    %285 = arith.addf %284, %283 : vector<2x128xf32>
    %286 = arith.divf %284, %285 : vector<2x128xf32>
    %287 = vector.extract_strided_slice %274 {offsets = [0, 256], sizes = [2, 128], strides = [1, 1]} : vector<2x512xf32> to vector<2x128xf32>
    %288 = math.tanh %287 : vector<2x128xf32>
    %289 = vector.extract_strided_slice %274 {offsets = [0, 384], sizes = [2, 128], strides = [1, 1]} : vector<2x512xf32> to vector<2x128xf32>
    %290 = arith.negf %289 : vector<2x128xf32>
    %291 = math.exp %290 : vector<2x128xf32>
    %cst_79 = arith.constant 1.000000e+00 : f32
    %292 = vector.broadcast %cst_79 : f32 to vector<2x128xf32>
    %293 = arith.addf %292, %291 : vector<2x128xf32>
    %294 = arith.divf %292, %293 : vector<2x128xf32>
    %295 = arith.mulf %286, %260 : vector<2x128xf32>
    %296 = arith.mulf %280, %288 : vector<2x128xf32>
    %297 = arith.addf %295, %296 : vector<2x128xf32>
    %298 = math.tanh %297 : vector<2x128xf32>
    %299 = arith.mulf %294, %298 : vector<2x128xf32>
    %300 = arith.index_cast %c7_i32 : i32 to index
    %c0_80 = arith.constant 0 : index
    %c0_81 = arith.constant 0 : index
    %301 = vector.load %arg5[%300, %c0_80, %c0_81] : memref<8x2x128xf32, #tpu.memory_space<vmem>>, vector<1x2x128xf32>
    %302 = vector.shape_cast %301 : vector<1x2x128xf32> to vector<2x128xf32>
    %303 = vector.shape_cast %299 : vector<2x128xf32> to vector<1x2x128xf32>
    tpu.vector_store %arg5[%300, %c0_80, %c0_81], %303 {strides = array<i32>} : memref<8x2x128xf32, #tpu.memory_space<vmem>>, vector<1x2x128xf32>,
    %c8_i32 = arith.constant 8 : i32
    %c0_82 = arith.constant 0 : index
    %c0_83 = arith.constant 0 : index
    %304 = vector.load %arg6[%c0_82, %c0_83] : memref<2x128xf32, #tpu.memory_space<vmem>>, vector<2x128xf32>
    tpu.vector_store %arg6[%c0_82, %c0_83], %299 {strides = array<i32>} : memref<2x128xf32, #tpu.memory_space<vmem>>, vector<2x128xf32>,
    %c0_84 = arith.constant 0 : index
    %c0_85 = arith.constant 0 : index
    %305 = vector.load %arg7[%c0_84, %c0_85] : memref<2x128xf32, #tpu.memory_space<vmem>>, vector<2x128xf32>
    tpu.vector_store %arg7[%c0_84, %c0_85], %297 {strides = array<i32>} : memref<2x128xf32, #tpu.memory_space<vmem>>, vector<2x128xf32>,
    return
  }
  func.func @transform_0(%arg0: i32) -> (i32, i32, i32) {
    %c0_i32 = arith.constant 0 : i32
    %c0_i32_0 = arith.constant 0 : i32
    %c0_i32_1 = arith.constant 0 : i32
    return %arg0, %c0_i32, %c0_i32_0 : i32, i32, i32
  }
  func.func @transform_1(%arg0: i32) -> (i32, i32) {
    %c0_i32 = arith.constant 0 : i32
    %c0_i32_0 = arith.constant 0 : i32
    %c0_i32_1 = arith.constant 0 : i32
    return %c0_i32, %c0_i32_0 : i32, i32
  }
  func.func @transform_2(%arg0: i32) -> (i32, i32) {
    %c0_i32 = arith.constant 0 : i32
    %c0_i32_0 = arith.constant 0 : i32
    %c0_i32_1 = arith.constant 0 : i32
    return %c0_i32, %c0_i32_0 : i32, i32
  }
  func.func @transform_3(%arg0: i32) -> (i32, i32) {
    %c0_i32 = arith.constant 0 : i32
    %c0_i32_0 = arith.constant 0 : i32
    %c0_i32_1 = arith.constant 0 : i32
    return %c0_i32, %c0_i32_0 : i32, i32
  }
  func.func @transform_4(%arg0: i32) -> (i32, i32, i32) {
    %c0_i32 = arith.constant 0 : i32
    %c0_i32_0 = arith.constant 0 : i32
    %c0_i32_1 = arith.constant 0 : i32
    return %arg0, %c0_i32, %c0_i32_0 : i32, i32, i32
  }
}

</mosaic_0001>

<llo_original>
// kernel: lstm_decoder_forward.1
$region0: #{lstm_decoder_forward.1}
  #allocation0 [shape = 'u32[]', space=smem, size = 0x4, offset = 0x4, fixed_abs, tag = 'smem constant byte address 0x4 - core index']
  #allocation1 [shape = 'u32[72,128]{1,0:T(1,128)}', space=vmem, size = 0x9000, scoped, tag = 'internal scratch']
  #allocation2 [shape = 'f32[2,128]{1,0:T(2,128)}', space=vmem, size = 0x400, scoped, tag = 'scratch operand']
  #allocation3 [shape = 'f32[2,128]{1,0:T(2,128)}', space=vmem, size = 0x400, scoped, tag = 'scratch operand']
  %s0 = inlined_call_operand.vmem [shape: f32[8,2,32], index: 0, kind: input, shape index: {}]
  %s1 = inlined_call_operand.vmem [shape: f32[32,512], index: 1, kind: input, shape index: {}]
  %s2 = inlined_call_operand.vmem [shape: f32[128,512], index: 2, kind: input, shape index: {}]
  %s3 = inlined_call_operand.vmem [shape: f32[1,512], index: 3, kind: input, shape index: {}]
  %s4 = inlined_call_operand.vmem [shape: f32[8,2,128], index: 4, kind: output, shape index: {}]
  %s5 = sld [smem:[#allocation0]]
  $region30: #{lstm_decoder_forward.1} parent=0
    _
  %s7 = ssub.s32 1, %s5
  %s8 = scalar_select 0, %s7, %s5
  // Predicated region
  $region2: #{lstm_decoder_forward.1} parent=0 // pred_check
    _
  $region3: #{lstm_decoder_forward.1} parent=0 // pred_check_branch
    %10 = sbr.rel (0) target = $region5
  $region4: #{lstm_decoder_forward.1} parent=0 // pred_region
    _
  $region5: #{lstm_decoder_forward.1} parent=0 // pred_fallthru
    _
  // Predicated region
  $region6: #{lstm_decoder_forward.1} parent=0 // pred_check
    _
  $region7: #{lstm_decoder_forward.1} parent=0 // pred_check_branch
    %12 = sbr.rel (0) target = $region9
  $region8: #{lstm_decoder_forward.1} parent=0 // pred_region
    _
  $region9: #{lstm_decoder_forward.1} parent=0 // pred_fallthru
    _
  // Predicated region
  $region10: #{lstm_decoder_forward.1} parent=0 // pred_check
    _
  $region11: #{lstm_decoder_forward.1} parent=0 // pred_check_branch
    %14 = sbr.rel (0) target = $region13
  $region12: #{lstm_decoder_forward.1} parent=0 // pred_region
    _
  $region13: #{lstm_decoder_forward.1} parent=0 // pred_fallthru
    _
  // Predicated region
  $region14: #{lstm_decoder_forward.1} parent=0 // pred_check
    _
  $region15: #{lstm_decoder_forward.1} parent=0 // pred_check_branch
    %16 = sbr.rel (0) target = $region17
  $region16: #{lstm_decoder_forward.1} parent=0 // pred_region
    _
  $region17: #{lstm_decoder_forward.1} parent=0 // pred_fallthru
    _
  %p17 = scmp.eq.s32.totalorder 0, 0
  // Predicated region
  $region18: #{lstm_decoder_forward.1} parent=0 // pred_check
    %p18 = pneg %p17
  $region19: #{lstm_decoder_forward.1} parent=0 // pred_check_branch
    %20 = sbr.rel (%p18) target = $region21
  $region20: #{lstm_decoder_forward.1} parent=0 // pred_region
    %21 = vst [vmem:[#allocation2] sm:$0x3] 0.0
    %22 = vst [vmem:[#allocation3] sm:$0x3] 0.0
  $region21: #{lstm_decoder_forward.1} parent=0 // pred_fallthru
    _
  %v23 = vld [vmem:[%s1] sm:$0xff]
  %v24 = vld [vmem:[%s1 + $0x8] sm:$0xff]
  %v25 = vld [vmem:[%s1 + $0x10] sm:$0xff]
  %v26 = vld [vmem:[%s1 + $0x18] sm:$0xff]
  %v27 = vld [vmem:[%s1 + $0x20] sm:$0xff]
  %v28 = vld [vmem:[%s1 + $0x28] sm:$0xff]
  %v29 = vld [vmem:[%s1 + $0x30] sm:$0xff]
  %v30 = vld [vmem:[%s1 + $0x38] sm:$0xff]
  %v31 = vld [vmem:[%s1 + $0x40] sm:$0xff]
  %v32 = vld [vmem:[%s1 + $0x48] sm:$0xff]
  %v33 = vld [vmem:[%s1 + $0x50] sm:$0xff]
  %v34 = vld [vmem:[%s1 + $0x58] sm:$0xff]
  %v35 = vld [vmem:[%s1 + $0x60] sm:$0xff]
  %v36 = vld [vmem:[%s1 + $0x68] sm:$0xff]
  %v37 = vld [vmem:[%s1 + $0x70] sm:$0xff]
  %v38 = vld [vmem:[%s1 + $0x78] sm:$0xff]
  %v39 = vld [vmem:[%s2] sm:$0xff]
  %v40 = vld [vmem:[%s2 + $0x8] sm:$0xff]
  %v41 = vld [vmem:[%s2 + $0x10] sm:$0xff]
  %v42 = vld [vmem:[%s2 + $0x18] sm:$0xff]
  %v43 = vld [vmem:[%s2 + $0x20] sm:$0xff]
  %v44 = vld [vmem:[%s2 + $0x28] sm:$0xff]
  %v45 = vld [vmem:[%s2 + $0x30] sm:$0xff]
  %v46 = vld [vmem:[%s2 + $0x38] sm:$0xff]
  %v47 = vld [vmem:[%s2 + $0x40] sm:$0xff]
  %v48 = vld [vmem:[%s2 + $0x48] sm:$0xff]
  %v49 = vld [vmem:[%s2 + $0x50] sm:$0xff]
  %v50 = vld [vmem:[%s2 + $0x58] sm:$0xff]
  %v51 = vld [vmem:[%s2 + $0x60] sm:$0xff]
  %v52 = vld [vmem:[%s2 + $0x68] sm:$0xff]
  %v53 = vld [vmem:[%s2 + $0x70] sm:$0xff]
  %v54 = vld [vmem:[%s2 + $0x78] sm:$0xff]
  %v55 = vld [vmem:[%s2 + $0x80] sm:$0xff]
  %v56 = vld [vmem:[%s2 + $0x88] sm:$0xff]
  %v57 = vld [vmem:[%s2 + $0x90] sm:$0xff]
  %v58 = vld [vmem:[%s2 + $0x98] sm:$0xff]
  %v59 = vld [vmem:[%s2 + $0xa0] sm:$0xff]
  %v60 = vld [vmem:[%s2 + $0xa8] sm:$0xff]
  %v61 = vld [vmem:[%s2 + $0xb0] sm:$0xff]
  %v62 = vld [vmem:[%s2 + $0xb8] sm:$0xff]
  %v63 = vld [vmem:[%s2 + $0xc0] sm:$0xff]
  %v64 = vld [vmem:[%s2 + $0xc8] sm:$0xff]
  %v65 = vld [vmem:[%s2 + $0xd0] sm:$0xff]
  %v66 = vld [vmem:[%s2 + $0xd8] sm:$0xff]
  %v67 = vld [vmem:[%s2 + $0xe0] sm:$0xff]
  %v68 = vld [vmem:[%s2 + $0xe8] sm:$0xff]
  %v69 = vld [vmem:[%s2 + $0xf0] sm:$0xff]
  %v70 = vld [vmem:[%s2 + $0xf8] sm:$0xff]
  %v71 = vld [vmem:[%s2 + $0x100] sm:$0xff]
  %v72 = vld [vmem:[%s2 + $0x108] sm:$0xff]
  %v73 = vld [vmem:[%s2 + $0x110] sm:$0xff]
  %v74 = vld [vmem:[%s2 + $0x118] sm:$0xff]
  %v75 = vld [vmem:[%s2 + $0x120] sm:$0xff]
  %v76 = vld [vmem:[%s2 + $0x128] sm:$0xff]
  %v77 = vld [vmem:[%s2 + $0x130] sm:$0xff]
  %v78 = vld [vmem:[%s2 + $0x138] sm:$0xff]
  %v79 = vld [vmem:[%s2 + $0x140] sm:$0xff]
  %v80 = vld [vmem:[%s2 + $0x148] sm:$0xff]
  %v81 = vld [vmem:[%s2 + $0x150] sm:$0xff]
  %v82 = vld [vmem:[%s2 + $0x158] sm:$0xff]
  %v83 = vld [vmem:[%s2 + $0x160] sm:$0xff]
  %v84 = vld [vmem:[%s2 + $0x168] sm:$0xff]
  %v85 = vld [vmem:[%s2 + $0x170] sm:$0xff]
  %v86 = vld [vmem:[%s2 + $0x178] sm:$0xff]
  %v87 = vld [vmem:[%s2 + $0x180] sm:$0xff]
  %v88 = vld [vmem:[%s2 + $0x188] sm:$0xff]
  %v89 = vld [vmem:[%s2 + $0x190] sm:$0xff]
  %v90 = vld [vmem:[%s2 + $0x198] sm:$0xff]
  %v91 = vld [vmem:[%s2 + $0x1a0] sm:$0xff]
  %v92 = vld [vmem:[%s2 + $0x1a8] sm:$0xff]
  %v93 = vld [vmem:[%s2 + $0x1b0] sm:$0xff]
  %v94 = vld [vmem:[%s2 + $0x1b8] sm:$0xff]
  %v95 = vld [vmem:[%s2 + $0x1c0] sm:$0xff]
  %v96 = vld [vmem:[%s2 + $0x1c8] sm:$0xff]
  %v97 = vld [vmem:[%s2 + $0x1d0] sm:$0xff]
  %v98 = vld [vmem:[%s2 + $0x1d8] sm:$0xff]
  %v99 = vld [vmem:[%s2 + $0x1e0] sm:$0xff]
  %v100 = vld [vmem:[%s2 + $0x1e8] sm:$0xff]
  %v101 = vld [vmem:[%s2 + $0x1f0] sm:$0xff]
  %v102 = vld [vmem:[%s2 + $0x1f8] sm:$0xff]
  %v103 = vld [vmem:[%s3] sm:$0xf]
  %v104 = vld [vmem:[#allocation2] sm:$0x3]
  %v105 = vld [vmem:[#allocation3] sm:$0x3]
  %v106 = vld [vmem:[%s0] sm:$0x3]
  %v108 = vperm.slane %v103, 0
  %v109 = vperm.slane %v103, 1
  %v110 = vperm.slane %v103, 2
  %v111 = vperm.slane %v103, 3
  %vm116 = vcmask 261120
  %v118 = vsel %vm116, %v106, 0
  %120 = vmatpush.msra.mxu0 0.0
  %121 = vmatpush.msra.mxu0 0.0
  %122 = vmatpush.msra.mxu0 0.0
  %123 = vmatpush.msra.mxu0 0.0
  %124 = vmatpush.msra.mxu0 0.0
  %125 = vmatpush.msra.mxu0 0.0
  %126 = vmatpush.msra.mxu0 0.0
  %127 = vmatpush.msra.mxu0 0.0
  %128 = vmatpush.msra.mxu0 0.0
  %129 = vmatpush.msra.mxu0 0.0
  %130 = vmatpush.msra.mxu0 0.0
  %131 = vmatpush.msra.mxu0 0.0
  %132 = vmatpush.msra.mxu0 %v35
  %133 = vmatpush.msra.mxu0 %v31
  %134 = vmatpush.msra.mxu0 %v27
  %135 = vmatpush.msra.mxu0 %v23
  %136 = vmatmul.f32.gmra.mxu0 %v118
  %v137 = vpop.f32.mrf.mxu0
  %v138 = vadd.f32 %v108, %v137
  %139 = vdwg.mxu0
  %140 = vmatpush.msra.mxu0 0.0
  %141 = vmatpush.msra.mxu0 0.0
  %142 = vmatpush.msra.mxu0 0.0
  %143 = vmatpush.msra.mxu0 0.0
  %144 = vmatpush.msra.mxu0 0.0
  %145 = vmatpush.msra.mxu0 0.0
  %146 = vmatpush.msra.mxu0 0.0
  %147 = vmatpush.msra.mxu0 0.0
  %148 = vmatpush.msra.mxu0 0.0
  %149 = vmatpush.msra.mxu0 0.0
  %150 = vmatpush.msra.mxu0 0.0
  %151 = vmatpush.msra.mxu0 0.0
  %152 = vmatpush.msra.mxu0 %v36
  %153 = vmatpush.msra.mxu0 %v32
  %154 = vmatpush.msra.mxu0 %v28
  %155 = vmatpush.msra.mxu0 %v24
  %156 = vmatmul.f32.gmra.mxu0 %v118
  %v157 = vpop.f32.mrf.mxu0
  %v158 = vadd.f32 %v109, %v157
  %159 = vdwg.mxu0
  %160 = vmatpush.msra.mxu0 0.0
  %161 = vmatpush.msra.mxu0 0.0
  %162 = vmatpush.msra.mxu0 0.0
  %163 = vmatpush.msra.mxu0 0.0
  %164 = vmatpush.msra.mxu0 0.0
  %165 = vmatpush.msra.mxu0 0.0
  %166 = vmatpush.msra.mxu0 0.0
  %167 = vmatpush.msra.mxu0 0.0
  %168 = vmatpush.msra.mxu0 0.0
  %169 = vmatpush.msra.mxu0 0.0
  %170 = vmatpush.msra.mxu0 0.0
  %171 = vmatpush.msra.mxu0 0.0
  %172 = vmatpush.msra.mxu0 %v37
  %173 = vmatpush.msra.mxu0 %v33
  %174 = vmatpush.msra.mxu0 %v29
  %175 = vmatpush.msra.mxu0 %v25
  %176 = vmatmul.f32.gmra.mxu0 %v118
  %v177 = vpop.f32.mrf.mxu0
  %v178 = vadd.f32 %v110, %v177
  %179 = vdwg.mxu0
  %180 = vmatpush.msra.mxu0 0.0
  %181 = vmatpush.msra.mxu0 0.0
  %182 = vmatpush.msra.mxu0 0.0
  %183 = vmatpush.msra.mxu0 0.0
  %184 = vmatpush.msra.mxu0 0.0
  %185 = vmatpush.msra.mxu0 0.0
  %186 = vmatpush.msra.mxu0 0.0
  %187 = vmatpush.msra.mxu0 0.0
  %188 = vmatpush.msra.mxu0 0.0
  %189 = vmatpush.msra.mxu0 0.0
  %190 = vmatpush.msra.mxu0 0.0
  %191 = vmatpush.msra.mxu0 0.0
  %192 = vmatpush.msra.mxu0 %v38
  %193 = vmatpush.msra.mxu0 %v34
  %194 = vmatpush.msra.mxu0 %v30
  %195 = vmatpush.msra.mxu0 %v26
  %196 = vmatmul.f32.gmra.mxu0 %v118
  %v197 = vpop.f32.mrf.mxu0
  %v198 = vadd.f32 %v111, %v197
  %199 = vdwg.mxu0
  %200 = vmatpush.msra.mxu0 %v99
  %201 = vmatpush.msra.mxu0 %v95
  %202 = vmatpush.msra.mxu0 %v91
  %203 = vmatpush.msra.mxu0 %v87
  %204 = vmatpush.msra.mxu0 %v83
  %205 = vmatpush.msra.mxu0 %v79
  %206 = vmatpush.msra.mxu0 %v75
  %207 = vmatpush.msra.mxu0 %v71
  %208 = vmatpush.msra.mxu0 %v67
  %209 = vmatpush.msra.mxu0 %v63
  %210 = vmatpush.msra.mxu0 %v59
  %211 = vmatpush.msra.mxu0 %v55
  %212 = vmatpush.msra.mxu0 %v51
  %213 = vmatpush.msra.mxu0 %v47
  %214 = vmatpush.msra.mxu0 %v43
  %215 = vmatpush.msra.mxu0 %v39
  %216 = vmatmul.f32.gmra.mxu0 %v104
  %v217 = vpop.f32.mrf.mxu0
  %v218 = vadd.f32 0.0, %v217
  %219 = vdwg.mxu0
  %220 = vmatpush.msra.mxu0 %v100
  %221 = vmatpush.msra.mxu0 %v96
  %222 = vmatpush.msra.mxu0 %v92
  %223 = vmatpush.msra.mxu0 %v88
  %224 = vmatpush.msra.mxu0 %v84
  %225 = vmatpush.msra.mxu0 %v80
  %226 = vmatpush.msra.mxu0 %v76
  %227 = vmatpush.msra.mxu0 %v72
  %228 = vmatpush.msra.mxu0 %v68
  %229 = vmatpush.msra.mxu0 %v64
  %230 = vmatpush.msra.mxu0 %v60
  %231 = vmatpush.msra.mxu0 %v56
  %232 = vmatpush.msra.mxu0 %v52
  %233 = vmatpush.msra.mxu0 %v48
  %234 = vmatpush.msra.mxu0 %v44
  %235 = vmatpush.msra.mxu0 %v40
  %236 = vmatmul.f32.gmra.mxu0 %v104
  %v237 = vpop.f32.mrf.mxu0
  %v238 = vadd.f32 0.0, %v237
  %239 = vdwg.mxu0
  %240 = vmatpush.msra.mxu0 %v101
  %241 = vmatpush.msra.mxu0 %v97
  %242 = vmatpush.msra.mxu0 %v93
  %243 = vmatpush.msra.mxu0 %v89
  %244 = vmatpush.msra.mxu0 %v85
  %245 = vmatpush.msra.mxu0 %v81
  %246 = vmatpush.msra.mxu0 %v77
  %247 = vmatpush.msra.mxu0 %v73
  %248 = vmatpush.msra.mxu0 %v69
  %249 = vmatpush.msra.mxu0 %v65
  %250 = vmatpush.msra.mxu0 %v61
  %251 = vmatpush.msra.mxu0 %v57
  %252 = vmatpush.msra.mxu0 %v53
  %253 = vmatpush.msra.mxu0 %v49
  %254 = vmatpush.msra.mxu0 %v45
  %255 = vmatpush.msra.mxu0 %v41
  %256 = vmatmul.f32.gmra.mxu0 %v104
  %v257 = vpop.f32.mrf.mxu0
  %v258 = vadd.f32 0.0, %v257
  %259 = vdwg.mxu0
  %260 = vmatpush.msra.mxu0 %v102
  %261 = vmatpush.msra.mxu0 %v98
  %262 = vmatpush.msra.mxu0 %v94
  %263 = vmatpush.msra.mxu0 %v90
  %264 = vmatpush.msra.mxu0 %v86
  %265 = vmatpush.msra.mxu0 %v82
  %266 = vmatpush.msra.mxu0 %v78
  %267 = vmatpush.msra.mxu0 %v74
  %268 = vmatpush.msra.mxu0 %v70
  %269 = vmatpush.msra.mxu0 %v66
  %270 = vmatpush.msra.mxu0 %v62
  %271 = vmatpush.msra.mxu0 %v58
  %272 = vmatpush.msra.mxu0 %v54
  %273 = vmatpush.msra.mxu0 %v50
  %274 = vmatpush.msra.mxu0 %v46
  %275 = vmatpush.msra.mxu0 %v42
  %276 = vmatmul.f32.gmra.mxu0 %v104
  %v277 = vpop.f32.mrf.mxu0
  %v278 = vadd.f32 0.0, %v277
  %279 = vdwg.mxu0
  %v280 = vadd.f32 %v138, %v218
  %v281 = vadd.f32 %v158, %v238
  %v282 = vadd.f32 %v178, %v258
  %v283 = vadd.f32 %v198, %v278
  %v284 = vxor.u32 %v280, 2147483648
  %v285 = vmul.f32 %v284, 1.442695
  %v286 = vpow.pop %v285
  %v287 = vadd.f32 %v286, 1.0
  %v288 = vrcp.pop %v287
  %v289 = vmul.f32 %v287, %v288
  %v290 = vsub.f32 1.0, %v289
  %v291 = vmul.f32 %v288, %v290
  %v292 = vadd.f32 %v288, %v291
  %vm293 = vweird.f32 %v287
  %vm294 = vweird.f32 %v288
  %vm295 = vmor %vm293, %vm294
  %v296 = vsel %vm295, %v288, %v292
  %v297 = vand.u32 2147483647, %v287
  %vm298 = vcmp.eq.f32.partialorder %v297, 8.507059e+37
  %v299 = vand.u32 %v287, 2147483648
  %v300 = vor.u32 1.1754944e-38, %v299
  %v301 = vsel %vm298, %v300, %v296
  %v302 = vmul.f32 1.0, %v301
  %v303 = vxor.u32 %v281, 2147483648
  %v304 = vmul.f32 %v303, 1.442695
  %v305 = vpow.pop %v304
  %v306 = vadd.f32 %v305, 1.0
  %v307 = vrcp.pop %v306
  %v308 = vmul.f32 %v306, %v307
  %v309 = vsub.f32 1.0, %v308
  %v310 = vmul.f32 %v307, %v309
  %v311 = vadd.f32 %v307, %v310
  %vm312 = vweird.f32 %v306
  %vm313 = vweird.f32 %v307
  %vm314 = vmor %vm312, %vm313
  %v315 = vsel %vm314, %v307, %v311
  %v316 = vand.u32 2147483647, %v306
  %vm317 = vcmp.eq.f32.partialorder %v316, 8.507059e+37
  %v318 = vand.u32 %v306, 2147483648
  %v319 = vor.u32 1.1754944e-38, %v318
  %v320 = vsel %vm317, %v319, %v315
  %v321 = vmul.f32 1.0, %v320
  %v322 = vtanh.pop %v282
  %v323 = vxor.u32 %v283, 2147483648
  %v324 = vmul.f32 %v323, 1.442695
  %v325 = vpow.pop %v324
  %v326 = vadd.f32 %v325, 1.0
  %v327 = vrcp.pop %v326
  %v328 = vmul.f32 %v326, %v327
  %v329 = vsub.f32 1.0, %v328
  %v330 = vmul.f32 %v327, %v329
  %v331 = vadd.f32 %v327, %v330
  %vm332 = vweird.f32 %v326
  %vm333 = vweird.f32 %v327
  %vm334 = vmor %vm332, %vm333
  %v335 = vsel %vm334, %v327, %v331
  %v336 = vand.u32 2147483647, %v326
  %vm337 = vcmp.eq.f32.partialorder %v336, 8.507059e+37
  %v338 = vand.u32 %v326, 2147483648
  %v339 = vor.u32 1.1754944e-38, %v338
  %v340 = vsel %vm337, %v339, %v335
  %v341 = vmul.f32 1.0, %v340
  %v342 = vmul.f32 %v321, %v105
  %v343 = vmul.f32 %v302, %v322
  %v344 = vadd.f32 %v342, %v343
  %v345 = vtanh.pop %v344
  %v346 = vmul.f32 %v341, %v345
  %347 = vst [vmem:[%s4] sm:$0x3] %v346
  %s348 = scalar_lea.vmem %s0, 2
  %v349 = vld [vmem:[%s348] sm:$0x3]
  %v351 = vsel %vm116, %v349, 0
  %353 = vmatpush.msra.mxu0 0.0
  %354 = vmatpush.msra.mxu0 0.0
  %355 = vmatpush.msra.mxu0 0.0
  %356 = vmatpush.msra.mxu0 0.0
  %357 = vmatpush.msra.mxu0 0.0
  %358 = vmatpush.msra.mxu0 0.0
  %359 = vmatpush.msra.mxu0 0.0
  %360 = vmatpush.msra.mxu0 0.0
  %361 = vmatpush.msra.mxu0 0.0
  %362 = vmatpush.msra.mxu0 0.0
  %363 = vmatpush.msra.mxu0 0.0
  %364 = vmatpush.msra.mxu0 0.0
  %365 = vmatpush.msra.mxu0 %v35
  %366 = vmatpush.msra.mxu0 %v31
  %367 = vmatpush.msra.mxu0 %v27
  %368 = vmatpush.msra.mxu0 %v23
  %369 = vmatmul.f32.gmra.mxu0 %v351
  %v370 = vpop.f32.mrf.mxu0
  %v371 = vadd.f32 %v108, %v370
  %372 = vdwg.mxu0
  %373 = vmatpush.msra.mxu0 0.0
  %374 = vmatpush.msra.mxu0 0.0
  %375 = vmatpush.msra.mxu0 0.0
  %376 = vmatpush.msra.mxu0 0.0
  %377 = vmatpush.msra.mxu0 0.0
  %378 = vmatpush.msra.mxu0 0.0
  %379 = vmatpush.msra.mxu0 0.0
  %380 = vmatpush.msra.mxu0 0.0
  %381 = vmatpush.msra.mxu0 0.0
  %382 = vmatpush.msra.mxu0 0.0
  %383 = vmatpush.msra.mxu0 0.0
  %384 = vmatpush.msra.mxu0 0.0
  %385 = vmatpush.msra.mxu0 %v36
  %386 = vmatpush.msra.mxu0 %v32
  %387 = vmatpush.msra.mxu0 %v28
  %388 = vmatpush.msra.mxu0 %v24
  %389 = vmatmul.f32.gmra.mxu0 %v351
  %v390 = vpop.f32.mrf.mxu0
  %v391 = vadd.f32 %v109, %v390
  %392 = vdwg.mxu0
  %393 = vmatpush.msra.mxu0 0.0
  %394 = vmatpush.msra.mxu0 0.0
  %395 = vmatpush.msra.mxu0 0.0
  %396 = vmatpush.msra.mxu0 0.0
  %397 = vmatpush.msra.mxu0 0.0
  %398 = vmatpush.msra.mxu0 0.0
  %399 = vmatpush.msra.mxu0 0.0
  %400 = vmatpush.msra.mxu0 0.0
  %401 = vmatpush.msra.mxu0 0.0
  %402 = vmatpush.msra.mxu0 0.0
  %403 = vmatpush.msra.mxu0 0.0
  %404 = vmatpush.msra.mxu0 0.0
  %405 = vmatpush.msra.mxu0 %v37
  %406 = vmatpush.msra.mxu0 %v33
  %407 = vmatpush.msra.mxu0 %v29
  %408 = vmatpush.msra.mxu0 %v25
  %409 = vmatmul.f32.gmra.mxu0 %v351
  %v410 = vpop.f32.mrf.mxu0
  %v411 = vadd.f32 %v110, %v410
  %412 = vdwg.mxu0
  %413 = vmatpush.msra.mxu0 0.0
  %414 = vmatpush.msra.mxu0 0.0
  %415 = vmatpush.msra.mxu0 0.0
  %416 = vmatpush.msra.mxu0 0.0
  %417 = vmatpush.msra.mxu0 0.0
  %418 = vmatpush.msra.mxu0 0.0
  %419 = vmatpush.msra.mxu0 0.0
  %420 = vmatpush.msra.mxu0 0.0
  %421 = vmatpush.msra.mxu0 0.0
  %422 = vmatpush.msra.mxu0 0.0
  %423 = vmatpush.msra.mxu0 0.0
  %424 = vmatpush.msra.mxu0 0.0
  %425 = vmatpush.msra.mxu0 %v38
  %426 = vmatpush.msra.mxu0 %v34
  %427 = vmatpush.msra.mxu0 %v30
  %428 = vmatpush.msra.mxu0 %v26
  %429 = vmatmul.f32.gmra.mxu0 %v351
  %v430 = vpop.f32.mrf.mxu0
  %v431 = vadd.f32 %v111, %v430
  %432 = vdwg.mxu0
  %433 = vmatpush.msra.mxu0 %v99
  %434 = vmatpush.msra.mxu0 %v95
  %435 = vmatpush.msra.mxu0 %v91
  %436 = vmatpush.msra.mxu0 %v87
  %437 = vmatpush.msra.mxu0 %v83
  %438 = vmatpush.msra.mxu0 %v79
  %439 = vmatpush.msra.mxu0 %v75
  %440 = vmatpush.msra.mxu0 %v71
  %441 = vmatpush.msra.mxu0 %v67
  %442 = vmatpush.msra.mxu0 %v63
  %443 = vmatpush.msra.mxu0 %v59
  %444 = vmatpush.msra.mxu0 %v55
  %445 = vmatpush.msra.mxu0 %v51
  %446 = vmatpush.msra.mxu0 %v47
  %447 = vmatpush.msra.mxu0 %v43
  %448 = vmatpush.msra.mxu0 %v39
  %449 = vmatmul.f32.gmra.mxu0 %v346
  %v450 = vpop.f32.mrf.mxu0
  %v451 = vadd.f32 0.0, %v450
  %452 = vdwg.mxu0
  %453 = vmatpush.msra.mxu0 %v100
  %454 = vmatpush.msra.mxu0 %v96
  %455 = vmatpush.msra.mxu0 %v92
  %456 = vmatpush.msra.mxu0 %v88
  %457 = vmatpush.msra.mxu0 %v84
  %458 = vmatpush.msra.mxu0 %v80
  %459 = vmatpush.msra.mxu0 %v76
  %460 = vmatpush.msra.mxu0 %v72
  %461 = vmatpush.msra.mxu0 %v68
  %462 = vmatpush.msra.mxu0 %v64
  %463 = vmatpush.msra.mxu0 %v60
  %464 = vmatpush.msra.mxu0 %v56
  %465 = vmatpush.msra.mxu0 %v52
  %466 = vmatpush.msra.mxu0 %v48
  %467 = vmatpush.msra.mxu0 %v44
  %468 = vmatpush.msra.mxu0 %v40
  %469 = vmatmul.f32.gmra.mxu0 %v346
  %v470 = vpop.f32.mrf.mxu0
  %v471 = vadd.f32 0.0, %v470
  %472 = vdwg.mxu0
  %473 = vmatpush.msra.mxu0 %v101
  %474 = vmatpush.msra.mxu0 %v97
  %475 = vmatpush.msra.mxu0 %v93
  %476 = vmatpush.msra.mxu0 %v89
  %477 = vmatpush.msra.mxu0 %v85
  %478 = vmatpush.msra.mxu0 %v81
  %479 = vmatpush.msra.mxu0 %v77
  %480 = vmatpush.msra.mxu0 %v73
  %481 = vmatpush.msra.mxu0 %v69
  %482 = vmatpush.msra.mxu0 %v65
  %483 = vmatpush.msra.mxu0 %v61
  %484 = vmatpush.msra.mxu0 %v57
  %485 = vmatpush.msra.mxu0 %v53
  %486 = vmatpush.msra.mxu0 %v49
  %487 = vmatpush.msra.mxu0 %v45
  %488 = vmatpush.msra.mxu0 %v41
  %489 = vmatmul.f32.gmra.mxu0 %v346
  %v490 = vpop.f32.mrf.mxu0
  %v491 = vadd.f32 0.0, %v490
  %492 = vdwg.mxu0
  %493 = vmatpush.msra.mxu0 %v102
  %494 = vmatpush.msra.mxu0 %v98
  %495 = vmatpush.msra.mxu0 %v94
  %496 = vmatpush.msra.mxu0 %v90
  %497 = vmatpush.msra.mxu0 %v86
  %498 = vmatpush.msra.mxu0 %v82
  %499 = vmatpush.msra.mxu0 %v78
  %500 = vmatpush.msra.mxu0 %v74
  %501 = vmatpush.msra.mxu0 %v70
  %502 = vmatpush.msra.mxu0 %v66
  %503 = vmatpush.msra.mxu0 %v62
  %504 = vmatpush.msra.mxu0 %v58
  %505 = vmatpush.msra.mxu0 %v54
  %506 = vmatpush.msra.mxu0 %v50
  %507 = vmatpush.msra.mxu0 %v46
  %508 = vmatpush.msra.mxu0 %v42
  %509 = vmatmul.f32.gmra.mxu0 %v346
  %v510 = vpop.f32.mrf.mxu0
  %v511 = vadd.f32 0.0, %v510
  %512 = vdwg.mxu0
  %v513 = vadd.f32 %v371, %v451
  %v514 = vadd.f32 %v391, %v471
  %v515 = vadd.f32 %v411, %v491
  %v516 = vadd.f32 %v431, %v511
  %v517 = vxor.u32 %v513, 2147483648
  %v518 = vmul.f32 %v517, 1.442695
  %v519 = vpow.pop %v518
  %v520 = vadd.f32 %v519, 1.0
  %v521 = vrcp.pop %v520
  %v522 = vmul.f32 %v520, %v521
  %v523 = vsub.f32 1.0, %v522
  %v524 = vmul.f32 %v521, %v523
  %v525 = vadd.f32 %v521, %v524
  %vm526 = vweird.f32 %v520
  %vm527 = vweird.f32 %v521
  %vm528 = vmor %vm526, %vm527
  %v529 = vsel %vm528, %v521, %v525
  %v530 = vand.u32 2147483647, %v520
  %vm531 = vcmp.eq.f32.partialorder %v530, 8.507059e+37
  %v532 = vand.u32 %v520, 2147483648
  %v533 = vor.u32 1.1754944e-38, %v532
  %v534 = vsel %vm531, %v533, %v529
  %v535 = vmul.f32 1.0, %v534
  %v536 = vxor.u32 %v514, 2147483648
  %v537 = vmul.f32 %v536, 1.442695
  %v538 = vpow.pop %v537
  %v539 = vadd.f32 %v538, 1.0
  %v540 = vrcp.pop %v539
  %v541 = vmul.f32 %v539, %v540
  %v542 = vsub.f32 1.0, %v541
  %v543 = vmul.f32 %v540, %v542
  %v544 = vadd.f32 %v540, %v543
  %vm545 = vweird.f32 %v539
  %vm546 = vweird.f32 %v540
  %vm547 = vmor %vm545, %vm546
  %v548 = vsel %vm547, %v540, %v544
  %v549 = vand.u32 2147483647, %v539
  %vm550 = vcmp.eq.f32.partialorder %v549, 8.507059e+37
  %v551 = vand.u32 %v539, 2147483648
  %v552 = vor.u32 1.1754944e-38, %v551
  %v553 = vsel %vm550, %v552, %v548
  %v554 = vmul.f32 1.0, %v553
  %v555 = vtanh.pop %v515
  %v556 = vxor.u32 %v516, 2147483648
  %v557 = vmul.f32 %v556, 1.442695
  %v558 = vpow.pop %v557
  %v559 = vadd.f32 %v558, 1.0
  %v560 = vrcp.pop %v559
  %v561 = vmul.f32 %v559, %v560
  %v562 = vsub.f32 1.0, %v561
  %v563 = vmul.f32 %v560, %v562
  %v564 = vadd.f32 %v560, %v563
  %vm565 = vweird.f32 %v559
  %vm566 = vweird.f32 %v560
  %vm567 = vmor %vm565, %vm566
  %v568 = vsel %vm567, %v560, %v564
  %v569 = vand.u32 2147483647, %v559
  %vm570 = vcmp.eq.f32.partialorder %v569, 8.507059e+37
  %v571 = vand.u32 %v559, 2147483648
  %v572 = vor.u32 1.1754944e-38, %v571
  %v573 = vsel %vm570, %v572, %v568
  %v574 = vmul.f32 1.0, %v573
  %v575 = vmul.f32 %v554, %v344
  %v576 = vmul.f32 %v535, %v555
  %v577 = vadd.f32 %v575, %v576
  %v578 = vtanh.pop %v577
  %v579 = vmul.f32 %v574, %v578
  %s580 = scalar_lea.vmem %s4, 2
  %581 = vst [vmem:[%s580] sm:$0x3] %v579
  %s582 = scalar_lea.vmem %s0, 4
  %v583 = vld [vmem:[%s582] sm:$0x3]
  %v585 = vsel %vm116, %v583, 0
  %587 = vmatpush.msra.mxu0 0.0
  %588 = vmatpush.msra.mxu0 0.0
  %589 = vmatpush.msra.mxu0 0.0
  %590 = vmatpush.msra.mxu0 0.0
  %591 = vmatpush.msra.mxu0 0.0
  %592 = vmatpush.msra.mxu0 0.0
  %593 = vmatpush.msra.mxu0 0.0
  %594 = vmatpush.msra.mxu0 0.0
  %595 = vmatpush.msra.mxu0 0.0
  %596 = vmatpush.msra.mxu0 0.0
  %597 = vmatpush.msra.mxu0 0.0
  %598 = vmatpush.msra.mxu0 0.0
  %599 = vmatpush.msra.mxu0 %v35
  %600 = vmatpush.msra.mxu0 %v31
  %601 = vmatpush.msra.mxu0 %v27
  %602 = vmatpush.msra.mxu0 %v23
  %603 = vmatmul.f32.gmra.mxu0 %v585
  %v604 = vpop.f32.mrf.mxu0
  %v605 = vadd.f32 %v108, %v604
  %606 = vdwg.mxu0
  %607 = vmatpush.msra.mxu0 0.0
  %608 = vmatpush.msra.mxu0 0.0
  %609 = vmatpush.msra.mxu0 0.0
  %610 = vmatpush.msra.mxu0 0.0
  %611 = vmatpush.msra.mxu0 0.0
  %612 = vmatpush.msra.mxu0 0.0
  %613 = vmatpush.msra.mxu0 0.0
  %614 = vmatpush.msra.mxu0 0.0
  %615 = vmatpush.msra.mxu0 0.0
  %616 = vmatpush.msra.mxu0 0.0
  %617 = vmatpush.msra.mxu0 0.0
  %618 = vmatpush.msra.mxu0 0.0
  %619 = vmatpush.msra.mxu0 %v36
  %620 = vmatpush.msra.mxu0 %v32
  %621 = vmatpush.msra.mxu0 %v28
  %622 = vmatpush.msra.mxu0 %v24
  %623 = vmatmul.f32.gmra.mxu0 %v585
  %v624 = vpop.f32.mrf.mxu0
  %v625 = vadd.f32 %v109, %v624
  %626 = vdwg.mxu0
  %627 = vmatpush.msra.mxu0 0.0
  %628 = vmatpush.msra.mxu0 0.0
  %629 = vmatpush.msra.mxu0 0.0
  %630 = vmatpush.msra.mxu0 0.0
  %631 = vmatpush.msra.mxu0 0.0
  %632 = vmatpush.msra.mxu0 0.0
  %633 = vmatpush.msra.mxu0 0.0
  %634 = vmatpush.msra.mxu0 0.0
  %635 = vmatpush.msra.mxu0 0.0
  %636 = vmatpush.msra.mxu0 0.0
  %637 = vmatpush.msra.mxu0 0.0
  %638 = vmatpush.msra.mxu0 0.0
  %639 = vmatpush.msra.mxu0 %v37
  %640 = vmatpush.msra.mxu0 %v33
  %641 = vmatpush.msra.mxu0 %v29
  %642 = vmatpush.msra.mxu0 %v25
  %643 = vmatmul.f32.gmra.mxu0 %v585
  %v644 = vpop.f32.mrf.mxu0
  %v645 = vadd.f32 %v110, %v644
  %646 = vdwg.mxu0
  %647 = vmatpush.msra.mxu0 0.0
  %648 = vmatpush.msra.mxu0 0.0
  %649 = vmatpush.msra.mxu0 0.0
  %650 = vmatpush.msra.mxu0 0.0
  %651 = vmatpush.msra.mxu0 0.0
  %652 = vmatpush.msra.mxu0 0.0
  %653 = vmatpush.msra.mxu0 0.0
  %654 = vmatpush.msra.mxu0 0.0
  %655 = vmatpush.msra.mxu0 0.0
  %656 = vmatpush.msra.mxu0 0.0
  %657 = vmatpush.msra.mxu0 0.0
  %658 = vmatpush.msra.mxu0 0.0
  %659 = vmatpush.msra.mxu0 %v38
  %660 = vmatpush.msra.mxu0 %v34
  %661 = vmatpush.msra.mxu0 %v30
  %662 = vmatpush.msra.mxu0 %v26
  %663 = vmatmul.f32.gmra.mxu0 %v585
  %v664 = vpop.f32.mrf.mxu0
  %v665 = vadd.f32 %v111, %v664
  %666 = vdwg.mxu0
  %667 = vmatpush.msra.mxu0 %v99
  %668 = vmatpush.msra.mxu0 %v95
  %669 = vmatpush.msra.mxu0 %v91
  %670 = vmatpush.msra.mxu0 %v87
  %671 = vmatpush.msra.mxu0 %v83
  %672 = vmatpush.msra.mxu0 %v79
  %673 = vmatpush.msra.mxu0 %v75
  %674 = vmatpush.msra.mxu0 %v71
  %675 = vmatpush.msra.mxu0 %v67
  %676 = vmatpush.msra.mxu0 %v63
  %677 = vmatpush.msra.mxu0 %v59
  %678 = vmatpush.msra.mxu0 %v55
  %679 = vmatpush.msra.mxu0 %v51
  %680 = vmatpush.msra.mxu0 %v47
  %681 = vmatpush.msra.mxu0 %v43
  %682 = vmatpush.msra.mxu0 %v39
  %683 = vmatmul.f32.gmra.mxu0 %v579
  %v684 = vpop.f32.mrf.mxu0
  %v685 = vadd.f32 0.0, %v684
  %686 = vdwg.mxu0
  %687 = vmatpush.msra.mxu0 %v100
  %688 = vmatpush.msra.mxu0 %v96
  %689 = vmatpush.msra.mxu0 %v92
  %690 = vmatpush.msra.mxu0 %v88
  %691 = vmatpush.msra.mxu0 %v84
  %692 = vmatpush.msra.mxu0 %v80
  %693 = vmatpush.msra.mxu0 %v76
  %694 = vmatpush.msra.mxu0 %v72
  %695 = vmatpush.msra.mxu0 %v68
  %696 = vmatpush.msra.mxu0 %v64
  %697 = vmatpush.msra.mxu0 %v60
  %698 = vmatpush.msra.mxu0 %v56
  %699 = vmatpush.msra.mxu0 %v52
  %700 = vmatpush.msra.mxu0 %v48
  %701 = vmatpush.msra.mxu0 %v44
  %702 = vmatpush.msra.mxu0 %v40
  %703 = vmatmul.f32.gmra.mxu0 %v579
  %v704 = vpop.f32.mrf.mxu0
  %v705 = vadd.f32 0.0, %v704
  %706 = vdwg.mxu0
  %707 = vmatpush.msra.mxu0 %v101
  %708 = vmatpush.msra.mxu0 %v97
  %709 = vmatpush.msra.mxu0 %v93
  %710 = vmatpush.msra.mxu0 %v89
  %711 = vmatpush.msra.mxu0 %v85
  %712 = vmatpush.msra.mxu0 %v81
  %713 = vmatpush.msra.mxu0 %v77
  %714 = vmatpush.msra.mxu0 %v73
  %715 = vmatpush.msra.mxu0 %v69
  %716 = vmatpush.msra.mxu0 %v65
  %717 = vmatpush.msra.mxu0 %v61
  %718 = vmatpush.msra.mxu0 %v57
  %719 = vmatpush.msra.mxu0 %v53
  %720 = vmatpush.msra.mxu0 %v49
  %721 = vmatpush.msra.mxu0 %v45
  %722 = vmatpush.msra.mxu0 %v41
  %723 = vmatmul.f32.gmra.mxu0 %v579
  %v724 = vpop.f32.mrf.mxu0
  %v725 = vadd.f32 0.0, %v724
  %726 = vdwg.mxu0
  %727 = vmatpush.msra.mxu0 %v102
  %728 = vmatpush.msra.mxu0 %v98
  %729 = vmatpush.msra.mxu0 %v94
  %730 = vmatpush.msra.mxu0 %v90
  %731 = vmatpush.msra.mxu0 %v86
  %732 = vmatpush.msra.mxu0 %v82
  %733 = vmatpush.msra.mxu0 %v78
  %734 = vmatpush.msra.mxu0 %v74
  %735 = vmatpush.msra.mxu0 %v70
  %736 = vmatpush.msra.mxu0 %v66
  %737 = vmatpush.msra.mxu0 %v62
  %738 = vmatpush.msra.mxu0 %v58
  %739 = vmatpush.msra.mxu0 %v54
  %740 = vmatpush.msra.mxu0 %v50
  %741 = vmatpush.msra.mxu0 %v46
  %742 = vmatpush.msra.mxu0 %v42
  %743 = vmatmul.f32.gmra.mxu0 %v579
  %v744 = vpop.f32.mrf.mxu0
  %v745 = vadd.f32 0.0, %v744
  %746 = vdwg.mxu0
  %v747 = vadd.f32 %v605, %v685
  %v748 = vadd.f32 %v625, %v705
  %v749 = vadd.f32 %v645, %v725
  %v750 = vadd.f32 %v665, %v745
  %v751 = vxor.u32 %v747, 2147483648
  %v752 = vmul.f32 %v751, 1.442695
  %v753 = vpow.pop %v752
  %v754 = vadd.f32 %v753, 1.0
  %v755 = vrcp.pop %v754
  %v756 = vmul.f32 %v754, %v755
  %v757 = vsub.f32 1.0, %v756
  %v758 = vmul.f32 %v755, %v757
  %v759 = vadd.f32 %v755, %v758
  %vm760 = vweird.f32 %v754
  %vm761 = vweird.f32 %v755
  %vm762 = vmor %vm760, %vm761
  %v763 = vsel %vm762, %v755, %v759
  %v764 = vand.u32 2147483647, %v754
  %vm765 = vcmp.eq.f32.partialorder %v764, 8.507059e+37
  %v766 = vand.u32 %v754, 2147483648
  %v767 = vor.u32 1.1754944e-38, %v766
  %v768 = vsel %vm765, %v767, %v763
  %v769 = vmul.f32 1.0, %v768
  %v770 = vxor.u32 %v748, 2147483648
  %v771 = vmul.f32 %v770, 1.442695
  %v772 = vpow.pop %v771
  %v773 = vadd.f32 %v772, 1.0
  %v774 = vrcp.pop %v773
  %v775 = vmul.f32 %v773, %v774
  %v776 = vsub.f32 1.0, %v775
  %v777 = vmul.f32 %v774, %v776
  %v778 = vadd.f32 %v774, %v777
  %vm779 = vweird.f32 %v773
  %vm780 = vweird.f32 %v774
  %vm781 = vmor %vm779, %vm780
  %v782 = vsel %vm781, %v774, %v778
  %v783 = vand.u32 2147483647, %v773
  %vm784 = vcmp.eq.f32.partialorder %v783, 8.507059e+37
  %v785 = vand.u32 %v773, 2147483648
  %v786 = vor.u32 1.1754944e-38, %v785
  %v787 = vsel %vm784, %v786, %v782
  %v788 = vmul.f32 1.0, %v787
  %v789 = vtanh.pop %v749
  %v790 = vxor.u32 %v750, 2147483648
  %v791 = vmul.f32 %v790, 1.442695
  %v792 = vpow.pop %v791
  %v793 = vadd.f32 %v792, 1.0
  %v794 = vrcp.pop %v793
  %v795 = vmul.f32 %v793, %v794
  %v796 = vsub.f32 1.0, %v795
  %v797 = vmul.f32 %v794, %v796
  %v798 = vadd.f32 %v794, %v797
  %vm799 = vweird.f32 %v793
  %vm800 = vweird.f32 %v794
  %vm801 = vmor %vm799, %vm800
  %v802 = vsel %vm801, %v794, %v798
  %v803 = vand.u32 2147483647, %v793
  %vm804 = vcmp.eq.f32.partialorder %v803, 8.507059e+37
  %v805 = vand.u32 %v793, 2147483648
  %v806 = vor.u32 1.1754944e-38, %v805
  %v807 = vsel %vm804, %v806, %v802
  %v808 = vmul.f32 1.0, %v807
  %v809 = vmul.f32 %v788, %v577
  %v810 = vmul.f32 %v769, %v789
  %v811 = vadd.f32 %v809, %v810
  %v812 = vtanh.pop %v811
  %v813 = vmul.f32 %v808, %v812
  %s814 = scalar_lea.vmem %s4, 4
  %815 = vst [vmem:[%s814] sm:$0x3] %v813
  %s816 = scalar_lea.vmem %s0, 6
  %v817 = vld [vmem:[%s816] sm:$0x3]
  %v819 = vsel %vm116, %v817, 0
  %821 = vmatpush.msra.mxu0 0.0
  %822 = vmatpush.msra.mxu0 0.0
  %823 = vmatpush.msra.mxu0 0.0
  %824 = vmatpush.msra.mxu0 0.0
  %825 = vmatpush.msra.mxu0 0.0
  %826 = vmatpush.msra.mxu0 0.0
  %827 = vmatpush.msra.mxu0 0.0
  %828 = vmatpush.msra.mxu0 0.0
  %829 = vmatpush.msra.mxu0 0.0
  %830 = vmatpush.msra.mxu0 0.0
  %831 = vmatpush.msra.mxu0 0.0
  %832 = vmatpush.msra.mxu0 0.0
  %833 = vmatpush.msra.mxu0 %v35
  %834 = vmatpush.msra.mxu0 %v31
  %835 = vmatpush.msra.mxu0 %v27
  %836 = vmatpush.msra.mxu0 %v23
  %837 = vmatmul.f32.gmra.mxu0 %v819
  %v838 = vpop.f32.mrf.mxu0
  %v839 = vadd.f32 %v108, %v838
  %840 = vdwg.mxu0
  %841 = vmatpush.msra.mxu0 0.0
  %842 = vmatpush.msra.mxu0 0.0
  %843 = vmatpush.msra.mxu0 0.0
  %844 = vmatpush.msra.mxu0 0.0
  %845 = vmatpush.msra.mxu0 0.0
  %846 = vmatpush.msra.mxu0 0.0
  %847 = vmatpush.msra.mxu0 0.0
  %848 = vmatpush.msra.mxu0 0.0
  %849 = vmatpush.msra.mxu0 0.0
  %850 = vmatpush.msra.mxu0 0.0
  %851 = vmatpush.msra.mxu0 0.0
  %852 = vmatpush.msra.mxu0 0.0
  %853 = vmatpush.msra.mxu0 %v36
  %854 = vmatpush.msra.mxu0 %v32
  %855 = vmatpush.msra.mxu0 %v28
  %856 = vmatpush.msra.mxu0 %v24
  %857 = vmatmul.f32.gmra.mxu0 %v819
  %v858 = vpop.f32.mrf.mxu0
  %v859 = vadd.f32 %v109, %v858
  %860 = vdwg.mxu0
  %861 = vmatpush.msra.mxu0 0.0
  %862 = vmatpush.msra.mxu0 0.0
  %863 = vmatpush.msra.mxu0 0.0
  %864 = vmatpush.msra.mxu0 0.0
  %865 = vmatpush.msra.mxu0 0.0
  %866 = vmatpush.msra.mxu0 0.0
  %867 = vmatpush.msra.mxu0 0.0
  %868 = vmatpush.msra.mxu0 0.0
  %869 = vmatpush.msra.mxu0 0.0
  %870 = vmatpush.msra.mxu0 0.0
  %871 = vmatpush.msra.mxu0 0.0
  %872 = vmatpush.msra.mxu0 0.0
  %873 = vmatpush.msra.mxu0 %v37
  %874 = vmatpush.msra.mxu0 %v33
  %875 = vmatpush.msra.mxu0 %v29
  %876 = vmatpush.msra.mxu0 %v25
  %877 = vmatmul.f32.gmra.mxu0 %v819
  %v878 = vpop.f32.mrf.mxu0
  %v879 = vadd.f32 %v110, %v878
  %880 = vdwg.mxu0
  %881 = vmatpush.msra.mxu0 0.0
  %882 = vmatpush.msra.mxu0 0.0
  %883 = vmatpush.msra.mxu0 0.0
  %884 = vmatpush.msra.mxu0 0.0
  %885 = vmatpush.msra.mxu0 0.0
  %886 = vmatpush.msra.mxu0 0.0
  %887 = vmatpush.msra.mxu0 0.0
  %888 = vmatpush.msra.mxu0 0.0
  %889 = vmatpush.msra.mxu0 0.0
  %890 = vmatpush.msra.mxu0 0.0
  %891 = vmatpush.msra.mxu0 0.0
  %892 = vmatpush.msra.mxu0 0.0
  %893 = vmatpush.msra.mxu0 %v38
  %894 = vmatpush.msra.mxu0 %v34
  %895 = vmatpush.msra.mxu0 %v30
  %896 = vmatpush.msra.mxu0 %v26
  %897 = vmatmul.f32.gmra.mxu0 %v819
  %v898 = vpop.f32.mrf.mxu0
  %v899 = vadd.f32 %v111, %v898
  %900 = vdwg.mxu0
  %901 = vmatpush.msra.mxu0 %v99
  %902 = vmatpush.msra.mxu0 %v95
  %903 = vmatpush.msra.mxu0 %v91
  %904 = vmatpush.msra.mxu0 %v87
  %905 = vmatpush.msra.mxu0 %v83
  %906 = vmatpush.msra.mxu0 %v79
  %907 = vmatpush.msra.mxu0 %v75
  %908 = vmatpush.msra.mxu0 %v71
  %909 = vmatpush.msra.mxu0 %v67
  %910 = vmatpush.msra.mxu0 %v63
  %911 = vmatpush.msra.mxu0 %v59
  %912 = vmatpush.msra.mxu0 %v55
  %913 = vmatpush.msra.mxu0 %v51
  %914 = vmatpush.msra.mxu0 %v47
  %915 = vmatpush.msra.mxu0 %v43
  %916 = vmatpush.msra.mxu0 %v39
  %917 = vmatmul.f32.gmra.mxu0 %v813
  %v918 = vpop.f32.mrf.mxu0
  %v919 = vadd.f32 0.0, %v918
  %920 = vdwg.mxu0
  %921 = vmatpush.msra.mxu0 %v100
  %922 = vmatpush.msra.mxu0 %v96
  %923 = vmatpush.msra.mxu0 %v92
  %924 = vmatpush.msra.mxu0 %v88
  %925 = vmatpush.msra.mxu0 %v84
  %926 = vmatpush.msra.mxu0 %v80
  %927 = vmatpush.msra.mxu0 %v76
  %928 = vmatpush.msra.mxu0 %v72
  %929 = vmatpush.msra.mxu0 %v68
  %930 = vmatpush.msra.mxu0 %v64
  %931 = vmatpush.msra.mxu0 %v60
  %932 = vmatpush.msra.mxu0 %v56
  %933 = vmatpush.msra.mxu0 %v52
  %934 = vmatpush.msra.mxu0 %v48
  %935 = vmatpush.msra.mxu0 %v44
  %936 = vmatpush.msra.mxu0 %v40
  %937 = vmatmul.f32.gmra.mxu0 %v813
  %v938 = vpop.f32.mrf.mxu0
  %v939 = vadd.f32 0.0, %v938
  %940 = vdwg.mxu0
  %941 = vmatpush.msra.mxu0 %v101
  %942 = vmatpush.msra.mxu0 %v97
  %943 = vmatpush.msra.mxu0 %v93
  %944 = vmatpush.msra.mxu0 %v89
  %945 = vmatpush.msra.mxu0 %v85
  %946 = vmatpush.msra.mxu0 %v81
  %947 = vmatpush.msra.mxu0 %v77
  %948 = vmatpush.msra.mxu0 %v73
  %949 = vmatpush.msra.mxu0 %v69
  %950 = vmatpush.msra.mxu0 %v65
  %951 = vmatpush.msra.mxu0 %v61
  %952 = vmatpush.msra.mxu0 %v57
  %953 = vmatpush.msra.mxu0 %v53
  %954 = vmatpush.msra.mxu0 %v49
  %955 = vmatpush.msra.mxu0 %v45
  %956 = vmatpush.msra.mxu0 %v41
  %957 = vmatmul.f32.gmra.mxu0 %v813
  %v958 = vpop.f32.mrf.mxu0
  %v959 = vadd.f32 0.0, %v958
  %960 = vdwg.mxu0
  %961 = vmatpush.msra.mxu0 %v102
  %962 = vmatpush.msra.mxu0 %v98
  %963 = vmatpush.msra.mxu0 %v94
  %964 = vmatpush.msra.mxu0 %v90
  %965 = vmatpush.msra.mxu0 %v86
  %966 = vmatpush.msra.mxu0 %v82
  %967 = vmatpush.msra.mxu0 %v78
  %968 = vmatpush.msra.mxu0 %v74
  %969 = vmatpush.msra.mxu0 %v70
  %970 = vmatpush.msra.mxu0 %v66
  %971 = vmatpush.msra.mxu0 %v62
  %972 = vmatpush.msra.mxu0 %v58
  %973 = vmatpush.msra.mxu0 %v54
  %974 = vmatpush.msra.mxu0 %v50
  %975 = vmatpush.msra.mxu0 %v46
  %976 = vmatpush.msra.mxu0 %v42
  %977 = vmatmul.f32.gmra.mxu0 %v813
  %v978 = vpop.f32.mrf.mxu0
  %v979 = vadd.f32 0.0, %v978
  %980 = vdwg.mxu0
  %v981 = vadd.f32 %v839, %v919
  %v982 = vadd.f32 %v859, %v939
  %v983 = vadd.f32 %v879, %v959
  %v984 = vadd.f32 %v899, %v979
  %v985 = vxor.u32 %v981, 2147483648
  %v986 = vmul.f32 %v985, 1.442695
  %v987 = vpow.pop %v986
  %v988 = vadd.f32 %v987, 1.0
  %v989 = vrcp.pop %v988
  %v990 = vmul.f32 %v988, %v989
  %v991 = vsub.f32 1.0, %v990
  %v992 = vmul.f32 %v989, %v991
  %v993 = vadd.f32 %v989, %v992
  %vm994 = vweird.f32 %v988
  %vm995 = vweird.f32 %v989
  %vm996 = vmor %vm994, %vm995
  %v997 = vsel %vm996, %v989, %v993
  %v998 = vand.u32 2147483647, %v988
  %vm999 = vcmp.eq.f32.partialorder %v998, 8.507059e+37
  %v1000 = vand.u32 %v988, 2147483648
  %v1001 = vor.u32 1.1754944e-38, %v1000
  %v1002 = vsel %vm999, %v1001, %v997
  %v1003 = vmul.f32 1.0, %v1002
  %v1004 = vxor.u32 %v982, 2147483648
  %v1005 = vmul.f32 %v1004, 1.442695
  %v1006 = vpow.pop %v1005
  %v1007 = vadd.f32 %v1006, 1.0
  %v1008 = vrcp.pop %v1007
  %v1009 = vmul.f32 %v1007, %v1008
  %v1010 = vsub.f32 1.0, %v1009
  %v1011 = vmul.f32 %v1008, %v1010
  %v1012 = vadd.f32 %v1008, %v1011
  %vm1013 = vweird.f32 %v1007
  %vm1014 = vweird.f32 %v1008
  %vm1015 = vmor %vm1013, %vm1014
  %v1016 = vsel %vm1015, %v1008, %v1012
  %v1017 = vand.u32 2147483647, %v1007
  %vm1018 = vcmp.eq.f32.partialorder %v1017, 8.507059e+37
  %v1019 = vand.u32 %v1007, 2147483648
  %v1020 = vor.u32 1.1754944e-38, %v1019
  %v1021 = vsel %vm1018, %v1020, %v1016
  %v1022 = vmul.f32 1.0, %v1021
  %v1023 = vtanh.pop %v983
  %v1024 = vxor.u32 %v984, 2147483648
  %v1025 = vmul.f32 %v1024, 1.442695
  %v1026 = vpow.pop %v1025
  %v1027 = vadd.f32 %v1026, 1.0
  %v1028 = vrcp.pop %v1027
  %v1029 = vmul.f32 %v1027, %v1028
  %v1030 = vsub.f32 1.0, %v1029
  %v1031 = vmul.f32 %v1028, %v1030
  %v1032 = vadd.f32 %v1028, %v1031
  %vm1033 = vweird.f32 %v1027
  %vm1034 = vweird.f32 %v1028
  %vm1035 = vmor %vm1033, %vm1034
  %v1036 = vsel %vm1035, %v1028, %v1032
  %v1037 = vand.u32 2147483647, %v1027
  %vm1038 = vcmp.eq.f32.partialorder %v1037, 8.507059e+37
  %v1039 = vand.u32 %v1027, 2147483648
  %v1040 = vor.u32 1.1754944e-38, %v1039
  %v1041 = vsel %vm1038, %v1040, %v1036
  %v1042 = vmul.f32 1.0, %v1041
  %v1043 = vmul.f32 %v1022, %v811
  %v1044 = vmul.f32 %v1003, %v1023
  %v1045 = vadd.f32 %v1043, %v1044
  %v1046 = vtanh.pop %v1045
  %v1047 = vmul.f32 %v1042, %v1046
  %s1048 = scalar_lea.vmem %s4, 6
  %1049 = vst [vmem:[%s1048] sm:$0x3] %v1047
  %s1050 = scalar_lea.vmem %s0, 8
  %v1051 = vld [vmem:[%s1050] sm:$0x3]
  %v1053 = vsel %vm116, %v1051, 0
  %1055 = vmatpush.msra.mxu0 0.0
  %1056 = vmatpush.msra.mxu0 0.0
  %1057 = vmatpush.msra.mxu0 0.0
  %1058 = vmatpush.msra.mxu0 0.0
  %1059 = vmatpush.msra.mxu0 0.0
  %1060 = vmatpush.msra.mxu0 0.0
  %1061 = vmatpush.msra.mxu0 0.0
  %1062 = vmatpush.msra.mxu0 0.0
  %1063 = vmatpush.msra.mxu0 0.0
  %1064 = vmatpush.msra.mxu0 0.0
  %1065 = vmatpush.msra.mxu0 0.0
  %1066 = vmatpush.msra.mxu0 0.0
  %1067 = vmatpush.msra.mxu0 %v35
  %1068 = vmatpush.msra.mxu0 %v31
  %1069 = vmatpush.msra.mxu0 %v27
  %1070 = vmatpush.msra.mxu0 %v23
  %1071 = vmatmul.f32.gmra.mxu0 %v1053
  %v1072 = vpop.f32.mrf.mxu0
  %v1073 = vadd.f32 %v108, %v1072
  %1074 = vdwg.mxu0
  %1075 = vmatpush.msra.mxu0 0.0
  %1076 = vmatpush.msra.mxu0 0.0
  %1077 = vmatpush.msra.mxu0 0.0
  %1078 = vmatpush.msra.mxu0 0.0
  %1079 = vmatpush.msra.mxu0 0.0
  %1080 = vmatpush.msra.mxu0 0.0
  %1081 = vmatpush.msra.mxu0 0.0
  %1082 = vmatpush.msra.mxu0 0.0
  %1083 = vmatpush.msra.mxu0 0.0
  %1084 = vmatpush.msra.mxu0 0.0
  %1085 = vmatpush.msra.mxu0 0.0
  %1086 = vmatpush.msra.mxu0 0.0
  %1087 = vmatpush.msra.mxu0 %v36
  %1088 = vmatpush.msra.mxu0 %v32
  %1089 = vmatpush.msra.mxu0 %v28
  %1090 = vmatpush.msra.mxu0 %v24
  %1091 = vmatmul.f32.gmra.mxu0 %v1053
  %v1092 = vpop.f32.mrf.mxu0
  %v1093 = vadd.f32 %v109, %v1092
  %1094 = vdwg.mxu0
  %1095 = vmatpush.msra.mxu0 0.0
  %1096 = vmatpush.msra.mxu0 0.0
  %1097 = vmatpush.msra.mxu0 0.0
  %1098 = vmatpush.msra.mxu0 0.0
  %1099 = vmatpush.msra.mxu0 0.0
  %1100 = vmatpush.msra.mxu0 0.0
  %1101 = vmatpush.msra.mxu0 0.0
  %1102 = vmatpush.msra.mxu0 0.0
  %1103 = vmatpush.msra.mxu0 0.0
  %1104 = vmatpush.msra.mxu0 0.0
  %1105 = vmatpush.msra.mxu0 0.0
  %1106 = vmatpush.msra.mxu0 0.0
  %1107 = vmatpush.msra.mxu0 %v37
  %1108 = vmatpush.msra.mxu0 %v33
  %1109 = vmatpush.msra.mxu0 %v29
  %1110 = vmatpush.msra.mxu0 %v25
  %1111 = vmatmul.f32.gmra.mxu0 %v1053
  %v1112 = vpop.f32.mrf.mxu0
  %v1113 = vadd.f32 %v110, %v1112
  %1114 = vdwg.mxu0
  %1115 = vmatpush.msra.mxu0 0.0
  %1116 = vmatpush.msra.mxu0 0.0
  %1117 = vmatpush.msra.mxu0 0.0
  %1118 = vmatpush.msra.mxu0 0.0
  %1119 = vmatpush.msra.mxu0 0.0
  %1120 = vmatpush.msra.mxu0 0.0
  %1121 = vmatpush.msra.mxu0 0.0
  %1122 = vmatpush.msra.mxu0 0.0
  %1123 = vmatpush.msra.mxu0 0.0
  %1124 = vmatpush.msra.mxu0 0.0
  %1125 = vmatpush.msra.mxu0 0.0
  %1126 = vmatpush.msra.mxu0 0.0
  %1127 = vmatpush.msra.mxu0 %v38
  %1128 = vmatpush.msra.mxu0 %v34
  %1129 = vmatpush.msra.mxu0 %v30
  %1130 = vmatpush.msra.mxu0 %v26
  %1131 = vmatmul.f32.gmra.mxu0 %v1053
  %v1132 = vpop.f32.mrf.mxu0
  %v1133 = vadd.f32 %v111, %v1132
  %1134 = vdwg.mxu0
  %1135 = vmatpush.msra.mxu0 %v99
  %1136 = vmatpush.msra.mxu0 %v95
  %1137 = vmatpush.msra.mxu0 %v91
  %1138 = vmatpush.msra.mxu0 %v87
  %1139 = vmatpush.msra.mxu0 %v83
  %1140 = vmatpush.msra.mxu0 %v79
  %1141 = vmatpush.msra.mxu0 %v75
  %1142 = vmatpush.msra.mxu0 %v71
  %1143 = vmatpush.msra.mxu0 %v67
  %1144 = vmatpush.msra.mxu0 %v63
  %1145 = vmatpush.msra.mxu0 %v59
  %1146 = vmatpush.msra.mxu0 %v55
  %1147 = vmatpush.msra.mxu0 %v51
  %1148 = vmatpush.msra.mxu0 %v47
  %1149 = vmatpush.msra.mxu0 %v43
  %1150 = vmatpush.msra.mxu0 %v39
  %1151 = vmatmul.f32.gmra.mxu0 %v1047
  %v1152 = vpop.f32.mrf.mxu0
  %v1153 = vadd.f32 0.0, %v1152
  %1154 = vdwg.mxu0
  %1155 = vmatpush.msra.mxu0 %v100
  %1156 = vmatpush.msra.mxu0 %v96
  %1157 = vmatpush.msra.mxu0 %v92
  %1158 = vmatpush.msra.mxu0 %v88
  %1159 = vmatpush.msra.mxu0 %v84
  %1160 = vmatpush.msra.mxu0 %v80
  %1161 = vmatpush.msra.mxu0 %v76
  %1162 = vmatpush.msra.mxu0 %v72
  %1163 = vmatpush.msra.mxu0 %v68
  %1164 = vmatpush.msra.mxu0 %v64
  %1165 = vmatpush.msra.mxu0 %v60
  %1166 = vmatpush.msra.mxu0 %v56
  %1167 = vmatpush.msra.mxu0 %v52
  %1168 = vmatpush.msra.mxu0 %v48
  %1169 = vmatpush.msra.mxu0 %v44
  %1170 = vmatpush.msra.mxu0 %v40
  %1171 = vmatmul.f32.gmra.mxu0 %v1047
  %v1172 = vpop.f32.mrf.mxu0
  %v1173 = vadd.f32 0.0, %v1172
  %1174 = vdwg.mxu0
  %1175 = vmatpush.msra.mxu0 %v101
  %1176 = vmatpush.msra.mxu0 %v97
  %1177 = vmatpush.msra.mxu0 %v93
  %1178 = vmatpush.msra.mxu0 %v89
  %1179 = vmatpush.msra.mxu0 %v85
  %1180 = vmatpush.msra.mxu0 %v81
  %1181 = vmatpush.msra.mxu0 %v77
  %1182 = vmatpush.msra.mxu0 %v73
  %1183 = vmatpush.msra.mxu0 %v69
  %1184 = vmatpush.msra.mxu0 %v65
  %1185 = vmatpush.msra.mxu0 %v61
  %1186 = vmatpush.msra.mxu0 %v57
  %1187 = vmatpush.msra.mxu0 %v53
  %1188 = vmatpush.msra.mxu0 %v49
  %1189 = vmatpush.msra.mxu0 %v45
  %1190 = vmatpush.msra.mxu0 %v41
  %1191 = vmatmul.f32.gmra.mxu0 %v1047
  %v1192 = vpop.f32.mrf.mxu0
  %v1193 = vadd.f32 0.0, %v1192
  %1194 = vdwg.mxu0
  %1195 = vmatpush.msra.mxu0 %v102
  %1196 = vmatpush.msra.mxu0 %v98
  %1197 = vmatpush.msra.mxu0 %v94
  %1198 = vmatpush.msra.mxu0 %v90
  %1199 = vmatpush.msra.mxu0 %v86
  %1200 = vmatpush.msra.mxu0 %v82
  %1201 = vmatpush.msra.mxu0 %v78
  %1202 = vmatpush.msra.mxu0 %v74
  %1203 = vmatpush.msra.mxu0 %v70
  %1204 = vmatpush.msra.mxu0 %v66
  %1205 = vmatpush.msra.mxu0 %v62
  %1206 = vmatpush.msra.mxu0 %v58
  %1207 = vmatpush.msra.mxu0 %v54
  %1208 = vmatpush.msra.mxu0 %v50
  %1209 = vmatpush.msra.mxu0 %v46
  %1210 = vmatpush.msra.mxu0 %v42
  %1211 = vmatmul.f32.gmra.mxu0 %v1047
  %v1212 = vpop.f32.mrf.mxu0
  %v1213 = vadd.f32 0.0, %v1212
  %1214 = vdwg.mxu0
  %v1215 = vadd.f32 %v1073, %v1153
  %v1216 = vadd.f32 %v1093, %v1173
  %v1217 = vadd.f32 %v1113, %v1193
  %v1218 = vadd.f32 %v1133, %v1213
  %v1219 = vxor.u32 %v1215, 2147483648
  %v1220 = vmul.f32 %v1219, 1.442695
  %v1221 = vpow.pop %v1220
  %v1222 = vadd.f32 %v1221, 1.0
  %v1223 = vrcp.pop %v1222
  %v1224 = vmul.f32 %v1222, %v1223
  %v1225 = vsub.f32 1.0, %v1224
  %v1226 = vmul.f32 %v1223, %v1225
  %v1227 = vadd.f32 %v1223, %v1226
  %vm1228 = vweird.f32 %v1222
  %vm1229 = vweird.f32 %v1223
  %vm1230 = vmor %vm1228, %vm1229
  %v1231 = vsel %vm1230, %v1223, %v1227
  %v1232 = vand.u32 2147483647, %v1222
  %vm1233 = vcmp.eq.f32.partialorder %v1232, 8.507059e+37
  %v1234 = vand.u32 %v1222, 2147483648
  %v1235 = vor.u32 1.1754944e-38, %v1234
  %v1236 = vsel %vm1233, %v1235, %v1231
  %v1237 = vmul.f32 1.0, %v1236
  %v1238 = vxor.u32 %v1216, 2147483648
  %v1239 = vmul.f32 %v1238, 1.442695
  %v1240 = vpow.pop %v1239
  %v1241 = vadd.f32 %v1240, 1.0
  %v1242 = vrcp.pop %v1241
  %v1243 = vmul.f32 %v1241, %v1242
  %v1244 = vsub.f32 1.0, %v1243
  %v1245 = vmul.f32 %v1242, %v1244
  %v1246 = vadd.f32 %v1242, %v1245
  %vm1247 = vweird.f32 %v1241
  %vm1248 = vweird.f32 %v1242
  %vm1249 = vmor %vm1247, %vm1248
  %v1250 = vsel %vm1249, %v1242, %v1246
  %v1251 = vand.u32 2147483647, %v1241
  %vm1252 = vcmp.eq.f32.partialorder %v1251, 8.507059e+37
  %v1253 = vand.u32 %v1241, 2147483648
  %v1254 = vor.u32 1.1754944e-38, %v1253
  %v1255 = vsel %vm1252, %v1254, %v1250
  %v1256 = vmul.f32 1.0, %v1255
  %v1257 = vtanh.pop %v1217
  %v1258 = vxor.u32 %v1218, 2147483648
  %v1259 = vmul.f32 %v1258, 1.442695
  %v1260 = vpow.pop %v1259
  %v1261 = vadd.f32 %v1260, 1.0
  %v1262 = vrcp.pop %v1261
  %v1263 = vmul.f32 %v1261, %v1262
  %v1264 = vsub.f32 1.0, %v1263
  %v1265 = vmul.f32 %v1262, %v1264
  %v1266 = vadd.f32 %v1262, %v1265
  %vm1267 = vweird.f32 %v1261
  %vm1268 = vweird.f32 %v1262
  %vm1269 = vmor %vm1267, %vm1268
  %v1270 = vsel %vm1269, %v1262, %v1266
  %v1271 = vand.u32 2147483647, %v1261
  %vm1272 = vcmp.eq.f32.partialorder %v1271, 8.507059e+37
  %v1273 = vand.u32 %v1261, 2147483648
  %v1274 = vor.u32 1.1754944e-38, %v1273
  %v1275 = vsel %vm1272, %v1274, %v1270
  %v1276 = vmul.f32 1.0, %v1275
  %v1277 = vmul.f32 %v1256, %v1045
  %v1278 = vmul.f32 %v1237, %v1257
  %v1279 = vadd.f32 %v1277, %v1278
  %v1280 = vtanh.pop %v1279
  %v1281 = vmul.f32 %v1276, %v1280
  %s1282 = scalar_lea.vmem %s4, 8
  %1283 = vst [vmem:[%s1282] sm:$0x3] %v1281
  %s1284 = scalar_lea.vmem %s0, 10
  %v1285 = vld [vmem:[%s1284] sm:$0x3]
  %v1287 = vsel %vm116, %v1285, 0
  %1289 = vmatpush.msra.mxu0 0.0
  %1290 = vmatpush.msra.mxu0 0.0
  %1291 = vmatpush.msra.mxu0 0.0
  %1292 = vmatpush.msra.mxu0 0.0
  %1293 = vmatpush.msra.mxu0 0.0
  %1294 = vmatpush.msra.mxu0 0.0
  %1295 = vmatpush.msra.mxu0 0.0
  %1296 = vmatpush.msra.mxu0 0.0
  %1297 = vmatpush.msra.mxu0 0.0
  %1298 = vmatpush.msra.mxu0 0.0
  %1299 = vmatpush.msra.mxu0 0.0
  %1300 = vmatpush.msra.mxu0 0.0
  %1301 = vmatpush.msra.mxu0 %v35
  %1302 = vmatpush.msra.mxu0 %v31
  %1303 = vmatpush.msra.mxu0 %v27
  %1304 = vmatpush.msra.mxu0 %v23
  %1305 = vmatmul.f32.gmra.mxu0 %v1287
  %v1306 = vpop.f32.mrf.mxu0
  %v1307 = vadd.f32 %v108, %v1306
  %1308 = vdwg.mxu0
  %1309 = vmatpush.msra.mxu0 0.0
  %1310 = vmatpush.msra.mxu0 0.0
  %1311 = vmatpush.msra.mxu0 0.0
  %1312 = vmatpush.msra.mxu0 0.0
  %1313 = vmatpush.msra.mxu0 0.0
  %1314 = vmatpush.msra.mxu0 0.0
  %1315 = vmatpush.msra.mxu0 0.0
  %1316 = vmatpush.msra.mxu0 0.0
  %1317 = vmatpush.msra.mxu0 0.0
  %1318 = vmatpush.msra.mxu0 0.0
  %1319 = vmatpush.msra.mxu0 0.0
  %1320 = vmatpush.msra.mxu0 0.0
  %1321 = vmatpush.msra.mxu0 %v36
  %1322 = vmatpush.msra.mxu0 %v32
  %1323 = vmatpush.msra.mxu0 %v28
  %1324 = vmatpush.msra.mxu0 %v24
  %1325 = vmatmul.f32.gmra.mxu0 %v1287
  %v1326 = vpop.f32.mrf.mxu0
  %v1327 = vadd.f32 %v109, %v1326
  %1328 = vdwg.mxu0
  %1329 = vmatpush.msra.mxu0 0.0
  %1330 = vmatpush.msra.mxu0 0.0
  %1331 = vmatpush.msra.mxu0 0.0
  %1332 = vmatpush.msra.mxu0 0.0
  %1333 = vmatpush.msra.mxu0 0.0
  %1334 = vmatpush.msra.mxu0 0.0
  %1335 = vmatpush.msra.mxu0 0.0
  %1336 = vmatpush.msra.mxu0 0.0
  %1337 = vmatpush.msra.mxu0 0.0
  %1338 = vmatpush.msra.mxu0 0.0
  %1339 = vmatpush.msra.mxu0 0.0
  %1340 = vmatpush.msra.mxu0 0.0
  %1341 = vmatpush.msra.mxu0 %v37
  %1342 = vmatpush.msra.mxu0 %v33
  %1343 = vmatpush.msra.mxu0 %v29
  %1344 = vmatpush.msra.mxu0 %v25
  %1345 = vmatmul.f32.gmra.mxu0 %v1287
  %v1346 = vpop.f32.mrf.mxu0
  %v1347 = vadd.f32 %v110, %v1346
  %1348 = vdwg.mxu0
  %1349 = vmatpush.msra.mxu0 0.0
  %1350 = vmatpush.msra.mxu0 0.0
  %1351 = vmatpush.msra.mxu0 0.0
  %1352 = vmatpush.msra.mxu0 0.0
  %1353 = vmatpush.msra.mxu0 0.0
  %1354 = vmatpush.msra.mxu0 0.0
  %1355 = vmatpush.msra.mxu0 0.0
  %1356 = vmatpush.msra.mxu0 0.0
  %1357 = vmatpush.msra.mxu0 0.0
  %1358 = vmatpush.msra.mxu0 0.0
  %1359 = vmatpush.msra.mxu0 0.0
  %1360 = vmatpush.msra.mxu0 0.0
  %1361 = vmatpush.msra.mxu0 %v38
  %1362 = vmatpush.msra.mxu0 %v34
  %1363 = vmatpush.msra.mxu0 %v30
  %1364 = vmatpush.msra.mxu0 %v26
  %1365 = vmatmul.f32.gmra.mxu0 %v1287
  %v1366 = vpop.f32.mrf.mxu0
  %v1367 = vadd.f32 %v111, %v1366
  %1368 = vdwg.mxu0
  %1369 = vmatpush.msra.mxu0 %v99
  %1370 = vmatpush.msra.mxu0 %v95
  %1371 = vmatpush.msra.mxu0 %v91
  %1372 = vmatpush.msra.mxu0 %v87
  %1373 = vmatpush.msra.mxu0 %v83
  %1374 = vmatpush.msra.mxu0 %v79
  %1375 = vmatpush.msra.mxu0 %v75
  %1376 = vmatpush.msra.mxu0 %v71
  %1377 = vmatpush.msra.mxu0 %v67
  %1378 = vmatpush.msra.mxu0 %v63
  %1379 = vmatpush.msra.mxu0 %v59
  %1380 = vmatpush.msra.mxu0 %v55
  %1381 = vmatpush.msra.mxu0 %v51
  %1382 = vmatpush.msra.mxu0 %v47
  %1383 = vmatpush.msra.mxu0 %v43
  %1384 = vmatpush.msra.mxu0 %v39
  %1385 = vmatmul.f32.gmra.mxu0 %v1281
  %v1386 = vpop.f32.mrf.mxu0
  %v1387 = vadd.f32 0.0, %v1386
  %1388 = vdwg.mxu0
  %1389 = vmatpush.msra.mxu0 %v100
  %1390 = vmatpush.msra.mxu0 %v96
  %1391 = vmatpush.msra.mxu0 %v92
  %1392 = vmatpush.msra.mxu0 %v88
  %1393 = vmatpush.msra.mxu0 %v84
  %1394 = vmatpush.msra.mxu0 %v80
  %1395 = vmatpush.msra.mxu0 %v76
  %1396 = vmatpush.msra.mxu0 %v72
  %1397 = vmatpush.msra.mxu0 %v68
  %1398 = vmatpush.msra.mxu0 %v64
  %1399 = vmatpush.msra.mxu0 %v60
  %1400 = vmatpush.msra.mxu0 %v56
  %1401 = vmatpush.msra.mxu0 %v52
  %1402 = vmatpush.msra.mxu0 %v48
  %1403 = vmatpush.msra.mxu0 %v44
  %1404 = vmatpush.msra.mxu0 %v40
  %1405 = vmatmul.f32.gmra.mxu0 %v1281
  %v1406 = vpop.f32.mrf.mxu0
  %v1407 = vadd.f32 0.0, %v1406
  %1408 = vdwg.mxu0
  %1409 = vmatpush.msra.mxu0 %v101
  %1410 = vmatpush.msra.mxu0 %v97
  %1411 = vmatpush.msra.mxu0 %v93
  %1412 = vmatpush.msra.mxu0 %v89
  %1413 = vmatpush.msra.mxu0 %v85
  %1414 = vmatpush.msra.mxu0 %v81
  %1415 = vmatpush.msra.mxu0 %v77
  %1416 = vmatpush.msra.mxu0 %v73
  %1417 = vmatpush.msra.mxu0 %v69
  %1418 = vmatpush.msra.mxu0 %v65
  %1419 = vmatpush.msra.mxu0 %v61
  %1420 = vmatpush.msra.mxu0 %v57
  %1421 = vmatpush.msra.mxu0 %v53
  %1422 = vmatpush.msra.mxu0 %v49
  %1423 = vmatpush.msra.mxu0 %v45
  %1424 = vmatpush.msra.mxu0 %v41
  %1425 = vmatmul.f32.gmra.mxu0 %v1281
  %v1426 = vpop.f32.mrf.mxu0
  %v1427 = vadd.f32 0.0, %v1426
  %1428 = vdwg.mxu0
  %1429 = vmatpush.msra.mxu0 %v102
  %1430 = vmatpush.msra.mxu0 %v98
  %1431 = vmatpush.msra.mxu0 %v94
  %1432 = vmatpush.msra.mxu0 %v90
  %1433 = vmatpush.msra.mxu0 %v86
  %1434 = vmatpush.msra.mxu0 %v82
  %1435 = vmatpush.msra.mxu0 %v78
  %1436 = vmatpush.msra.mxu0 %v74
  %1437 = vmatpush.msra.mxu0 %v70
  %1438 = vmatpush.msra.mxu0 %v66
  %1439 = vmatpush.msra.mxu0 %v62
  %1440 = vmatpush.msra.mxu0 %v58
  %1441 = vmatpush.msra.mxu0 %v54
  %1442 = vmatpush.msra.mxu0 %v50
  %1443 = vmatpush.msra.mxu0 %v46
  %1444 = vmatpush.msra.mxu0 %v42
  %1445 = vmatmul.f32.gmra.mxu0 %v1281
  %v1446 = vpop.f32.mrf.mxu0
  %v1447 = vadd.f32 0.0, %v1446
  %1448 = vdwg.mxu0
  %v1449 = vadd.f32 %v1307, %v1387
  %v1450 = vadd.f32 %v1327, %v1407
  %v1451 = vadd.f32 %v1347, %v1427
  %v1452 = vadd.f32 %v1367, %v1447
  %v1453 = vxor.u32 %v1449, 2147483648
  %v1454 = vmul.f32 %v1453, 1.442695
  %v1455 = vpow.pop %v1454
  %v1456 = vadd.f32 %v1455, 1.0
  %v1457 = vrcp.pop %v1456
  %v1458 = vmul.f32 %v1456, %v1457
  %v1459 = vsub.f32 1.0, %v1458
  %v1460 = vmul.f32 %v1457, %v1459
  %v1461 = vadd.f32 %v1457, %v1460
  %vm1462 = vweird.f32 %v1456
  %vm1463 = vweird.f32 %v1457
  %vm1464 = vmor %vm1462, %vm1463
  %v1465 = vsel %vm1464, %v1457, %v1461
  %v1466 = vand.u32 2147483647, %v1456
  %vm1467 = vcmp.eq.f32.partialorder %v1466, 8.507059e+37
  %v1468 = vand.u32 %v1456, 2147483648
  %v1469 = vor.u32 1.1754944e-38, %v1468
  %v1470 = vsel %vm1467, %v1469, %v1465
  %v1471 = vmul.f32 1.0, %v1470
  %v1472 = vxor.u32 %v1450, 2147483648
  %v1473 = vmul.f32 %v1472, 1.442695
  %v1474 = vpow.pop %v1473
  %v1475 = vadd.f32 %v1474, 1.0
  %v1476 = vrcp.pop %v1475
  %v1477 = vmul.f32 %v1475, %v1476
  %v1478 = vsub.f32 1.0, %v1477
  %v1479 = vmul.f32 %v1476, %v1478
  %v1480 = vadd.f32 %v1476, %v1479
  %vm1481 = vweird.f32 %v1475
  %vm1482 = vweird.f32 %v1476
  %vm1483 = vmor %vm1481, %vm1482
  %v1484 = vsel %vm1483, %v1476, %v1480
  %v1485 = vand.u32 2147483647, %v1475
  %vm1486 = vcmp.eq.f32.partialorder %v1485, 8.507059e+37
  %v1487 = vand.u32 %v1475, 2147483648
  %v1488 = vor.u32 1.1754944e-38, %v1487
  %v1489 = vsel %vm1486, %v1488, %v1484
  %v1490 = vmul.f32 1.0, %v1489
  %v1491 = vtanh.pop %v1451
  %v1492 = vxor.u32 %v1452, 2147483648
  %v1493 = vmul.f32 %v1492, 1.442695
  %v1494 = vpow.pop %v1493
  %v1495 = vadd.f32 %v1494, 1.0
  %v1496 = vrcp.pop %v1495
  %v1497 = vmul.f32 %v1495, %v1496
  %v1498 = vsub.f32 1.0, %v1497
  %v1499 = vmul.f32 %v1496, %v1498
  %v1500 = vadd.f32 %v1496, %v1499
  %vm1501 = vweird.f32 %v1495
  %vm1502 = vweird.f32 %v1496
  %vm1503 = vmor %vm1501, %vm1502
  %v1504 = vsel %vm1503, %v1496, %v1500
  %v1505 = vand.u32 2147483647, %v1495
  %vm1506 = vcmp.eq.f32.partialorder %v1505, 8.507059e+37
  %v1507 = vand.u32 %v1495, 2147483648
  %v1508 = vor.u32 1.1754944e-38, %v1507
  %v1509 = vsel %vm1506, %v1508, %v1504
  %v1510 = vmul.f32 1.0, %v1509
  %v1511 = vmul.f32 %v1490, %v1279
  %v1512 = vmul.f32 %v1471, %v1491
  %v1513 = vadd.f32 %v1511, %v1512
  %v1514 = vtanh.pop %v1513
  %v1515 = vmul.f32 %v1510, %v1514
  %s1516 = scalar_lea.vmem %s4, 10
  %1517 = vst [vmem:[%s1516] sm:$0x3] %v1515
  %s1518 = scalar_lea.vmem %s0, 12
  %v1519 = vld [vmem:[%s1518] sm:$0x3]
  %v1521 = vsel %vm116, %v1519, 0
  %1523 = vmatpush.msra.mxu0 0.0
  %1524 = vmatpush.msra.mxu0 0.0
  %1525 = vmatpush.msra.mxu0 0.0
  %1526 = vmatpush.msra.mxu0 0.0
  %1527 = vmatpush.msra.mxu0 0.0
  %1528 = vmatpush.msra.mxu0 0.0
  %1529 = vmatpush.msra.mxu0 0.0
  %1530 = vmatpush.msra.mxu0 0.0
  %1531 = vmatpush.msra.mxu0 0.0
  %1532 = vmatpush.msra.mxu0 0.0
  %1533 = vmatpush.msra.mxu0 0.0
  %1534 = vmatpush.msra.mxu0 0.0
  %1535 = vmatpush.msra.mxu0 %v35
  %1536 = vmatpush.msra.mxu0 %v31
  %1537 = vmatpush.msra.mxu0 %v27
  %1538 = vmatpush.msra.mxu0 %v23
  %1539 = vmatmul.f32.gmra.mxu0 %v1521
  %v1540 = vpop.f32.mrf.mxu0
  %v1541 = vadd.f32 %v108, %v1540
  %1542 = vdwg.mxu0
  %1543 = vmatpush.msra.mxu0 0.0
  %1544 = vmatpush.msra.mxu0 0.0
  %1545 = vmatpush.msra.mxu0 0.0
  %1546 = vmatpush.msra.mxu0 0.0
  %1547 = vmatpush.msra.mxu0 0.0
  %1548 = vmatpush.msra.mxu0 0.0
  %1549 = vmatpush.msra.mxu0 0.0
  %1550 = vmatpush.msra.mxu0 0.0
  %1551 = vmatpush.msra.mxu0 0.0
  %1552 = vmatpush.msra.mxu0 0.0
  %1553 = vmatpush.msra.mxu0 0.0
  %1554 = vmatpush.msra.mxu0 0.0
  %1555 = vmatpush.msra.mxu0 %v36
  %1556 = vmatpush.msra.mxu0 %v32
  %1557 = vmatpush.msra.mxu0 %v28
  %1558 = vmatpush.msra.mxu0 %v24
  %1559 = vmatmul.f32.gmra.mxu0 %v1521
  %v1560 = vpop.f32.mrf.mxu0
  %v1561 = vadd.f32 %v109, %v1560
  %1562 = vdwg.mxu0
  %1563 = vmatpush.msra.mxu0 0.0
  %1564 = vmatpush.msra.mxu0 0.0
  %1565 = vmatpush.msra.mxu0 0.0
  %1566 = vmatpush.msra.mxu0 0.0
  %1567 = vmatpush.msra.mxu0 0.0
  %1568 = vmatpush.msra.mxu0 0.0
  %1569 = vmatpush.msra.mxu0 0.0
  %1570 = vmatpush.msra.mxu0 0.0
  %1571 = vmatpush.msra.mxu0 0.0
  %1572 = vmatpush.msra.mxu0 0.0
  %1573 = vmatpush.msra.mxu0 0.0
  %1574 = vmatpush.msra.mxu0 0.0
  %1575 = vmatpush.msra.mxu0 %v37
  %1576 = vmatpush.msra.mxu0 %v33
  %1577 = vmatpush.msra.mxu0 %v29
  %1578 = vmatpush.msra.mxu0 %v25
  %1579 = vmatmul.f32.gmra.mxu0 %v1521
  %v1580 = vpop.f32.mrf.mxu0
  %v1581 = vadd.f32 %v110, %v1580
  %1582 = vdwg.mxu0
  %1583 = vmatpush.msra.mxu0 0.0
  %1584 = vmatpush.msra.mxu0 0.0
  %1585 = vmatpush.msra.mxu0 0.0
  %1586 = vmatpush.msra.mxu0 0.0
  %1587 = vmatpush.msra.mxu0 0.0
  %1588 = vmatpush.msra.mxu0 0.0
  %1589 = vmatpush.msra.mxu0 0.0
  %1590 = vmatpush.msra.mxu0 0.0
  %1591 = vmatpush.msra.mxu0 0.0
  %1592 = vmatpush.msra.mxu0 0.0
  %1593 = vmatpush.msra.mxu0 0.0
  %1594 = vmatpush.msra.mxu0 0.0
  %1595 = vmatpush.msra.mxu0 %v38
  %1596 = vmatpush.msra.mxu0 %v34
  %1597 = vmatpush.msra.mxu0 %v30
  %1598 = vmatpush.msra.mxu0 %v26
  %1599 = vmatmul.f32.gmra.mxu0 %v1521
  %v1600 = vpop.f32.mrf.mxu0
  %v1601 = vadd.f32 %v111, %v1600
  %1602 = vdwg.mxu0
  %1603 = vmatpush.msra.mxu0 %v99
  %1604 = vmatpush.msra.mxu0 %v95
  %1605 = vmatpush.msra.mxu0 %v91
  %1606 = vmatpush.msra.mxu0 %v87
  %1607 = vmatpush.msra.mxu0 %v83
  %1608 = vmatpush.msra.mxu0 %v79
  %1609 = vmatpush.msra.mxu0 %v75
  %1610 = vmatpush.msra.mxu0 %v71
  %1611 = vmatpush.msra.mxu0 %v67
  %1612 = vmatpush.msra.mxu0 %v63
  %1613 = vmatpush.msra.mxu0 %v59
  %1614 = vmatpush.msra.mxu0 %v55
  %1615 = vmatpush.msra.mxu0 %v51
  %1616 = vmatpush.msra.mxu0 %v47
  %1617 = vmatpush.msra.mxu0 %v43
  %1618 = vmatpush.msra.mxu0 %v39
  %1619 = vmatmul.f32.gmra.mxu0 %v1515
  %v1620 = vpop.f32.mrf.mxu0
  %v1621 = vadd.f32 0.0, %v1620
  %1622 = vdwg.mxu0
  %1623 = vmatpush.msra.mxu0 %v100
  %1624 = vmatpush.msra.mxu0 %v96
  %1625 = vmatpush.msra.mxu0 %v92
  %1626 = vmatpush.msra.mxu0 %v88
  %1627 = vmatpush.msra.mxu0 %v84
  %1628 = vmatpush.msra.mxu0 %v80
  %1629 = vmatpush.msra.mxu0 %v76
  %1630 = vmatpush.msra.mxu0 %v72
  %1631 = vmatpush.msra.mxu0 %v68
  %1632 = vmatpush.msra.mxu0 %v64
  %1633 = vmatpush.msra.mxu0 %v60
  %1634 = vmatpush.msra.mxu0 %v56
  %1635 = vmatpush.msra.mxu0 %v52
  %1636 = vmatpush.msra.mxu0 %v48
  %1637 = vmatpush.msra.mxu0 %v44
  %1638 = vmatpush.msra.mxu0 %v40
  %1639 = vmatmul.f32.gmra.mxu0 %v1515
  %v1640 = vpop.f32.mrf.mxu0
  %v1641 = vadd.f32 0.0, %v1640
  %1642 = vdwg.mxu0
  %1643 = vmatpush.msra.mxu0 %v101
  %1644 = vmatpush.msra.mxu0 %v97
  %1645 = vmatpush.msra.mxu0 %v93
  %1646 = vmatpush.msra.mxu0 %v89
  %1647 = vmatpush.msra.mxu0 %v85
  %1648 = vmatpush.msra.mxu0 %v81
  %1649 = vmatpush.msra.mxu0 %v77
  %1650 = vmatpush.msra.mxu0 %v73
  %1651 = vmatpush.msra.mxu0 %v69
  %1652 = vmatpush.msra.mxu0 %v65
  %1653 = vmatpush.msra.mxu0 %v61
  %1654 = vmatpush.msra.mxu0 %v57
  %1655 = vmatpush.msra.mxu0 %v53
  %1656 = vmatpush.msra.mxu0 %v49
  %1657 = vmatpush.msra.mxu0 %v45
  %1658 = vmatpush.msra.mxu0 %v41
  %1659 = vmatmul.f32.gmra.mxu0 %v1515
  %v1660 = vpop.f32.mrf.mxu0
  %v1661 = vadd.f32 0.0, %v1660
  %1662 = vdwg.mxu0
  %1663 = vmatpush.msra.mxu0 %v102
  %1664 = vmatpush.msra.mxu0 %v98
  %1665 = vmatpush.msra.mxu0 %v94
  %1666 = vmatpush.msra.mxu0 %v90
  %1667 = vmatpush.msra.mxu0 %v86
  %1668 = vmatpush.msra.mxu0 %v82
  %1669 = vmatpush.msra.mxu0 %v78
  %1670 = vmatpush.msra.mxu0 %v74
  %1671 = vmatpush.msra.mxu0 %v70
  %1672 = vmatpush.msra.mxu0 %v66
  %1673 = vmatpush.msra.mxu0 %v62
  %1674 = vmatpush.msra.mxu0 %v58
  %1675 = vmatpush.msra.mxu0 %v54
  %1676 = vmatpush.msra.mxu0 %v50
  %1677 = vmatpush.msra.mxu0 %v46
  %1678 = vmatpush.msra.mxu0 %v42
  %1679 = vmatmul.f32.gmra.mxu0 %v1515
  %v1680 = vpop.f32.mrf.mxu0
  %v1681 = vadd.f32 0.0, %v1680
  %1682 = vdwg.mxu0
  %v1683 = vadd.f32 %v1541, %v1621
  %v1684 = vadd.f32 %v1561, %v1641
  %v1685 = vadd.f32 %v1581, %v1661
  %v1686 = vadd.f32 %v1601, %v1681
  %v1687 = vxor.u32 %v1683, 2147483648
  %v1688 = vmul.f32 %v1687, 1.442695
  %v1689 = vpow.pop %v1688
  %v1690 = vadd.f32 %v1689, 1.0
  %v1691 = vrcp.pop %v1690
  %v1692 = vmul.f32 %v1690, %v1691
  %v1693 = vsub.f32 1.0, %v1692
  %v1694 = vmul.f32 %v1691, %v1693
  %v1695 = vadd.f32 %v1691, %v1694
  %vm1696 = vweird.f32 %v1690
  %vm1697 = vweird.f32 %v1691
  %vm1698 = vmor %vm1696, %vm1697
  %v1699 = vsel %vm1698, %v1691, %v1695
  %v1700 = vand.u32 2147483647, %v1690
  %vm1701 = vcmp.eq.f32.partialorder %v1700, 8.507059e+37
  %v1702 = vand.u32 %v1690, 2147483648
  %v1703 = vor.u32 1.1754944e-38, %v1702
  %v1704 = vsel %vm1701, %v1703, %v1699
  %v1705 = vmul.f32 1.0, %v1704
  %v1706 = vxor.u32 %v1684, 2147483648
  %v1707 = vmul.f32 %v1706, 1.442695
  %v1708 = vpow.pop %v1707
  %v1709 = vadd.f32 %v1708, 1.0
  %v1710 = vrcp.pop %v1709
  %v1711 = vmul.f32 %v1709, %v1710
  %v1712 = vsub.f32 1.0, %v1711
  %v1713 = vmul.f32 %v1710, %v1712
  %v1714 = vadd.f32 %v1710, %v1713
  %vm1715 = vweird.f32 %v1709
  %vm1716 = vweird.f32 %v1710
  %vm1717 = vmor %vm1715, %vm1716
  %v1718 = vsel %vm1717, %v1710, %v1714
  %v1719 = vand.u32 2147483647, %v1709
  %vm1720 = vcmp.eq.f32.partialorder %v1719, 8.507059e+37
  %v1721 = vand.u32 %v1709, 2147483648
  %v1722 = vor.u32 1.1754944e-38, %v1721
  %v1723 = vsel %vm1720, %v1722, %v1718
  %v1724 = vmul.f32 1.0, %v1723
  %v1725 = vtanh.pop %v1685
  %v1726 = vxor.u32 %v1686, 2147483648
  %v1727 = vmul.f32 %v1726, 1.442695
  %v1728 = vpow.pop %v1727
  %v1729 = vadd.f32 %v1728, 1.0
  %v1730 = vrcp.pop %v1729
  %v1731 = vmul.f32 %v1729, %v1730
  %v1732 = vsub.f32 1.0, %v1731
  %v1733 = vmul.f32 %v1730, %v1732
  %v1734 = vadd.f32 %v1730, %v1733
  %vm1735 = vweird.f32 %v1729
  %vm1736 = vweird.f32 %v1730
  %vm1737 = vmor %vm1735, %vm1736
  %v1738 = vsel %vm1737, %v1730, %v1734
  %v1739 = vand.u32 2147483647, %v1729
  %vm1740 = vcmp.eq.f32.partialorder %v1739, 8.507059e+37
  %v1741 = vand.u32 %v1729, 2147483648
  %v1742 = vor.u32 1.1754944e-38, %v1741
  %v1743 = vsel %vm1740, %v1742, %v1738
  %v1744 = vmul.f32 1.0, %v1743
  %v1745 = vmul.f32 %v1724, %v1513
  %v1746 = vmul.f32 %v1705, %v1725
  %v1747 = vadd.f32 %v1745, %v1746
  %v1748 = vtanh.pop %v1747
  %v1749 = vmul.f32 %v1744, %v1748
  %s1750 = scalar_lea.vmem %s4, 12
  %1751 = vst [vmem:[%s1750] sm:$0x3] %v1749
  %s1752 = scalar_lea.vmem %s0, 14
  %v1753 = vld [vmem:[%s1752] sm:$0x3]
  %v1755 = vsel %vm116, %v1753, 0
  %1757 = vmatpush.msra.mxu0 0.0
  %1758 = vmatpush.msra.mxu0 0.0
  %1759 = vmatpush.msra.mxu0 0.0
  %1760 = vmatpush.msra.mxu0 0.0
  %1761 = vmatpush.msra.mxu0 0.0
  %1762 = vmatpush.msra.mxu0 0.0
  %1763 = vmatpush.msra.mxu0 0.0
  %1764 = vmatpush.msra.mxu0 0.0
  %1765 = vmatpush.msra.mxu0 0.0
  %1766 = vmatpush.msra.mxu0 0.0
  %1767 = vmatpush.msra.mxu0 0.0
  %1768 = vmatpush.msra.mxu0 0.0
  %1769 = vmatpush.msra.mxu0 %v35
  %1770 = vmatpush.msra.mxu0 %v31
  %1771 = vmatpush.msra.mxu0 %v27
  %1772 = vmatpush.msra.mxu0 %v23
  %1773 = vmatmul.f32.gmra.mxu0 %v1755
  %v1774 = vpop.f32.mrf.mxu0
  %v1775 = vadd.f32 %v108, %v1774
  %1776 = vdwg.mxu0
  %1777 = vmatpush.msra.mxu0 0.0
  %1778 = vmatpush.msra.mxu0 0.0
  %1779 = vmatpush.msra.mxu0 0.0
  %1780 = vmatpush.msra.mxu0 0.0
  %1781 = vmatpush.msra.mxu0 0.0
  %1782 = vmatpush.msra.mxu0 0.0
  %1783 = vmatpush.msra.mxu0 0.0
  %1784 = vmatpush.msra.mxu0 0.0
  %1785 = vmatpush.msra.mxu0 0.0
  %1786 = vmatpush.msra.mxu0 0.0
  %1787 = vmatpush.msra.mxu0 0.0
  %1788 = vmatpush.msra.mxu0 0.0
  %1789 = vmatpush.msra.mxu0 %v36
  %1790 = vmatpush.msra.mxu0 %v32
  %1791 = vmatpush.msra.mxu0 %v28
  %1792 = vmatpush.msra.mxu0 %v24
  %1793 = vmatmul.f32.gmra.mxu0 %v1755
  %v1794 = vpop.f32.mrf.mxu0
  %v1795 = vadd.f32 %v109, %v1794
  %1796 = vdwg.mxu0
  %1797 = vmatpush.msra.mxu0 0.0
  %1798 = vmatpush.msra.mxu0 0.0
  %1799 = vmatpush.msra.mxu0 0.0
  %1800 = vmatpush.msra.mxu0 0.0
  %1801 = vmatpush.msra.mxu0 0.0
  %1802 = vmatpush.msra.mxu0 0.0
  %1803 = vmatpush.msra.mxu0 0.0
  %1804 = vmatpush.msra.mxu0 0.0
  %1805 = vmatpush.msra.mxu0 0.0
  %1806 = vmatpush.msra.mxu0 0.0
  %1807 = vmatpush.msra.mxu0 0.0
  %1808 = vmatpush.msra.mxu0 0.0
  %1809 = vmatpush.msra.mxu0 %v37
  %1810 = vmatpush.msra.mxu0 %v33
  %1811 = vmatpush.msra.mxu0 %v29
  %1812 = vmatpush.msra.mxu0 %v25
  %1813 = vmatmul.f32.gmra.mxu0 %v1755
  %v1814 = vpop.f32.mrf.mxu0
  %v1815 = vadd.f32 %v110, %v1814
  %1816 = vdwg.mxu0
  %1817 = vmatpush.msra.mxu0 0.0
  %1818 = vmatpush.msra.mxu0 0.0
  %1819 = vmatpush.msra.mxu0 0.0
  %1820 = vmatpush.msra.mxu0 0.0
  %1821 = vmatpush.msra.mxu0 0.0
  %1822 = vmatpush.msra.mxu0 0.0
  %1823 = vmatpush.msra.mxu0 0.0
  %1824 = vmatpush.msra.mxu0 0.0
  %1825 = vmatpush.msra.mxu0 0.0
  %1826 = vmatpush.msra.mxu0 0.0
  %1827 = vmatpush.msra.mxu0 0.0
  %1828 = vmatpush.msra.mxu0 0.0
  %1829 = vmatpush.msra.mxu0 %v38
  %1830 = vmatpush.msra.mxu0 %v34
  %1831 = vmatpush.msra.mxu0 %v30
  %1832 = vmatpush.msra.mxu0 %v26
  %1833 = vmatmul.f32.gmra.mxu0 %v1755
  %v1834 = vpop.f32.mrf.mxu0
  %v1835 = vadd.f32 %v111, %v1834
  %1836 = vdwg.mxu0
  %1837 = vmatpush.msra.mxu0 %v99
  %1838 = vmatpush.msra.mxu0 %v95
  %1839 = vmatpush.msra.mxu0 %v91
  %1840 = vmatpush.msra.mxu0 %v87
  %1841 = vmatpush.msra.mxu0 %v83
  %1842 = vmatpush.msra.mxu0 %v79
  %1843 = vmatpush.msra.mxu0 %v75
  %1844 = vmatpush.msra.mxu0 %v71
  %1845 = vmatpush.msra.mxu0 %v67
  %1846 = vmatpush.msra.mxu0 %v63
  %1847 = vmatpush.msra.mxu0 %v59
  %1848 = vmatpush.msra.mxu0 %v55
  %1849 = vmatpush.msra.mxu0 %v51
  %1850 = vmatpush.msra.mxu0 %v47
  %1851 = vmatpush.msra.mxu0 %v43
  %1852 = vmatpush.msra.mxu0 %v39
  %1853 = vmatmul.f32.gmra.mxu0 %v1749
  %v1854 = vpop.f32.mrf.mxu0
  %v1855 = vadd.f32 0.0, %v1854
  %1856 = vdwg.mxu0
  %1857 = vmatpush.msra.mxu0 %v100
  %1858 = vmatpush.msra.mxu0 %v96
  %1859 = vmatpush.msra.mxu0 %v92
  %1860 = vmatpush.msra.mxu0 %v88
  %1861 = vmatpush.msra.mxu0 %v84
  %1862 = vmatpush.msra.mxu0 %v80
  %1863 = vmatpush.msra.mxu0 %v76
  %1864 = vmatpush.msra.mxu0 %v72
  %1865 = vmatpush.msra.mxu0 %v68
  %1866 = vmatpush.msra.mxu0 %v64
  %1867 = vmatpush.msra.mxu0 %v60
  %1868 = vmatpush.msra.mxu0 %v56
  %1869 = vmatpush.msra.mxu0 %v52
  %1870 = vmatpush.msra.mxu0 %v48
  %1871 = vmatpush.msra.mxu0 %v44
  %1872 = vmatpush.msra.mxu0 %v40
  %1873 = vmatmul.f32.gmra.mxu0 %v1749
  %v1874 = vpop.f32.mrf.mxu0
  %v1875 = vadd.f32 0.0, %v1874
  %1876 = vdwg.mxu0
  %1877 = vmatpush.msra.mxu0 %v101
  %1878 = vmatpush.msra.mxu0 %v97
  %1879 = vmatpush.msra.mxu0 %v93
  %1880 = vmatpush.msra.mxu0 %v89
  %1881 = vmatpush.msra.mxu0 %v85
  %1882 = vmatpush.msra.mxu0 %v81
  %1883 = vmatpush.msra.mxu0 %v77
  %1884 = vmatpush.msra.mxu0 %v73
  %1885 = vmatpush.msra.mxu0 %v69
  %1886 = vmatpush.msra.mxu0 %v65
  %1887 = vmatpush.msra.mxu0 %v61
  %1888 = vmatpush.msra.mxu0 %v57
  %1889 = vmatpush.msra.mxu0 %v53
  %1890 = vmatpush.msra.mxu0 %v49
  %1891 = vmatpush.msra.mxu0 %v45
  %1892 = vmatpush.msra.mxu0 %v41
  %1893 = vmatmul.f32.gmra.mxu0 %v1749
  %v1894 = vpop.f32.mrf.mxu0
  %v1895 = vadd.f32 0.0, %v1894
  %1896 = vdwg.mxu0
  %1897 = vmatpush.msra.mxu0 %v102
  %1898 = vmatpush.msra.mxu0 %v98
  %1899 = vmatpush.msra.mxu0 %v94
  %1900 = vmatpush.msra.mxu0 %v90
  %1901 = vmatpush.msra.mxu0 %v86
  %1902 = vmatpush.msra.mxu0 %v82
  %1903 = vmatpush.msra.mxu0 %v78
  %1904 = vmatpush.msra.mxu0 %v74
  %1905 = vmatpush.msra.mxu0 %v70
  %1906 = vmatpush.msra.mxu0 %v66
  %1907 = vmatpush.msra.mxu0 %v62
  %1908 = vmatpush.msra.mxu0 %v58
  %1909 = vmatpush.msra.mxu0 %v54
  %1910 = vmatpush.msra.mxu0 %v50
  %1911 = vmatpush.msra.mxu0 %v46
  %1912 = vmatpush.msra.mxu0 %v42
  %1913 = vmatmul.f32.gmra.mxu0 %v1749
  %v1914 = vpop.f32.mrf.mxu0
  %v1915 = vadd.f32 0.0, %v1914
  %1916 = vdwg.mxu0
  %v1917 = vadd.f32 %v1775, %v1855
  %v1918 = vadd.f32 %v1795, %v1875
  %v1919 = vadd.f32 %v1815, %v1895
  %v1920 = vadd.f32 %v1835, %v1915
  %v1921 = vxor.u32 %v1917, 2147483648
  %v1922 = vmul.f32 %v1921, 1.442695
  %v1923 = vpow.pop %v1922
  %v1924 = vadd.f32 %v1923, 1.0
  %v1925 = vrcp.pop %v1924
  %v1926 = vmul.f32 %v1924, %v1925
  %v1927 = vsub.f32 1.0, %v1926
  %v1928 = vmul.f32 %v1925, %v1927
  %v1929 = vadd.f32 %v1925, %v1928
  %vm1930 = vweird.f32 %v1924
  %vm1931 = vweird.f32 %v1925
  %vm1932 = vmor %vm1930, %vm1931
  %v1933 = vsel %vm1932, %v1925, %v1929
  %v1934 = vand.u32 2147483647, %v1924
  %vm1935 = vcmp.eq.f32.partialorder %v1934, 8.507059e+37
  %v1936 = vand.u32 %v1924, 2147483648
  %v1937 = vor.u32 1.1754944e-38, %v1936
  %v1938 = vsel %vm1935, %v1937, %v1933
  %v1939 = vmul.f32 1.0, %v1938
  %v1940 = vxor.u32 %v1918, 2147483648
  %v1941 = vmul.f32 %v1940, 1.442695
  %v1942 = vpow.pop %v1941
  %v1943 = vadd.f32 %v1942, 1.0
  %v1944 = vrcp.pop %v1943
  %v1945 = vmul.f32 %v1943, %v1944
  %v1946 = vsub.f32 1.0, %v1945
  %v1947 = vmul.f32 %v1944, %v1946
  %v1948 = vadd.f32 %v1944, %v1947
  %vm1949 = vweird.f32 %v1943
  %vm1950 = vweird.f32 %v1944
  %vm1951 = vmor %vm1949, %vm1950
  %v1952 = vsel %vm1951, %v1944, %v1948
  %v1953 = vand.u32 2147483647, %v1943
  %vm1954 = vcmp.eq.f32.partialorder %v1953, 8.507059e+37
  %v1955 = vand.u32 %v1943, 2147483648
  %v1956 = vor.u32 1.1754944e-38, %v1955
  %v1957 = vsel %vm1954, %v1956, %v1952
  %v1958 = vmul.f32 1.0, %v1957
  %v1959 = vtanh.pop %v1919
  %v1960 = vxor.u32 %v1920, 2147483648
  %v1961 = vmul.f32 %v1960, 1.442695
  %v1962 = vpow.pop %v1961
  %v1963 = vadd.f32 %v1962, 1.0
  %v1964 = vrcp.pop %v1963
  %v1965 = vmul.f32 %v1963, %v1964
  %v1966 = vsub.f32 1.0, %v1965
  %v1967 = vmul.f32 %v1964, %v1966
  %v1968 = vadd.f32 %v1964, %v1967
  %vm1969 = vweird.f32 %v1963
  %vm1970 = vweird.f32 %v1964
  %vm1971 = vmor %vm1969, %vm1970
  %v1972 = vsel %vm1971, %v1964, %v1968
  %v1973 = vand.u32 2147483647, %v1963
  %vm1974 = vcmp.eq.f32.partialorder %v1973, 8.507059e+37
  %v1975 = vand.u32 %v1963, 2147483648
  %v1976 = vor.u32 1.1754944e-38, %v1975
  %v1977 = vsel %vm1974, %v1976, %v1972
  %v1978 = vmul.f32 1.0, %v1977
  %v1979 = vmul.f32 %v1958, %v1747
  %v1980 = vmul.f32 %v1939, %v1959
  %v1981 = vadd.f32 %v1979, %v1980
  %v1982 = vtanh.pop %v1981
  %v1983 = vmul.f32 %v1978, %v1982
  %s1984 = scalar_lea.vmem %s4, 14
  %1985 = vst [vmem:[%s1984] sm:$0x3] %v1983
  %1986 = vst [vmem:[#allocation2] sm:$0x3] %v1983
  %1987 = vst [vmem:[#allocation3] sm:$0x3] %v1981
  // Predicated region
  $region22: #{lstm_decoder_forward.1} parent=0 // pred_check
    _
  $region23: #{lstm_decoder_forward.1} parent=0 // pred_check_branch
    %1989 = sbr.rel (0) target = $region25
  $region24: #{lstm_decoder_forward.1} parent=0 // pred_region
    _
  $region25: #{lstm_decoder_forward.1} parent=0 // pred_fallthru
    _
  // Predicated region
  $region26: #{lstm_decoder_forward.1} parent=0 // pred_check
    _
  $region27: #{lstm_decoder_forward.1} parent=0 // pred_check_branch
    %1991 = sbr.rel (0) target = $region29
  $region28: #{lstm_decoder_forward.1} parent=0 // pred_region
    _
  $region29: #{lstm_decoder_forward.1} parent=0 // pred_fallthru
    _

</llo_original>
